<compile_context>
chip_gen: v7x
topology: tpu7x:2x2x1
jax: 0.10.0
libtpu: 0.0.40
codegen_flags: <defaults>
</compile_context>

<pallas_src>
import math

import jax
import jax.numpy as jnp
from jax.experimental import pallas as pl
from jax.experimental.pallas import tpu as pltpu


def _round_up(x, m):
    return (x + m - 1) // m * m


def _vmem_capacity_bytes():
    """Per-core VMEM capacity (v5e/v6e: 128 MiB, v7x: 64 MiB); conservative fallback."""
    try:
        cap = getattr(pltpu.get_tpu_info(), "vmem_capacity_bytes", None)
        if cap:
            return int(cap)
    except Exception:
        pass
    return 64 << 20


def _lgconv_kernel(alpha_ref, a_ref, w_ref, b_ref, feat_hbm_ref, out_ref,
                   cur_ref, acc_ref, mm_ref, copy_sem):
    """One grid step of the fused LGConv forward.

    Grid: (hop h [slowest], dst tile d, src panel s [reduction, fastest]).

    alpha_ref:    SMEM (k+1,)            f32  per-hop scalar weights
    a_ref:        VMEM (TILE_D, TK)      bf16 row panel of normalized adjacency A_hat[dst, src]
    w_ref:        VMEM (F_pad, Fo_pad)   bf16 padded, pre-transposed fc weight
    b_ref:        VMEM (1, Fo_pad)       f32  padded fc bias, pre-scaled by (k+1)
    feat_hbm_ref: HBM  (N_pad, F_pad)    bf16 padded input features (manual DMA, once)
    out_ref:      VMEM (TILE_D, Fo_pad)  f32  output tile for dst block d
    cur_ref:      VMEM (2*N_pad, F_pad)  bf16 ping-pong buffers holding f_h / f_{h+1}
    acc_ref:      VMEM (N_pad, F_pad)    f32  running sum_i alpha_i * f_i
    mm_ref:       VMEM (TILE_D, F_pad)   f32  partial A_hat[d, :] @ f_h product
    copy_sem:     DMA semaphore for the one-time feat copy
    """
    h = pl.program_id(0)
    d = pl.program_id(1)
    s = pl.program_id(2)
    ns = pl.num_programs(2)
    last_hop = pl.num_programs(0) - 1

    tile_d = a_ref.shape[0]
    tk = a_ref.shape[1]
    n_pad = acc_ref.shape[0]

    # One-time init: DMA f_0 into ping-pong slot 1 (the read slot for hop 0) and start
    # the alpha-weighted running sum.
    @pl.when((h == 0) & (d == 0) & (s == 0))
    def _init():
        cp = pltpu.make_async_copy(feat_hbm_ref,
                                   cur_ref.at[pl.ds(n_pad, n_pad), :],
                                   copy_sem)
        cp.start()
        cp.wait()
        acc_ref[...] = alpha_ref[0] * cur_ref[pl.ds(n_pad, n_pad), :].astype(jnp.float32)

    # f_{h+1}[d] (+)= A_hat[d, s-panel] @ f_h[s-panel]   (bf16 x bf16 MXU, f32 accumulation)
    read_slot = (h + 1) & 1                              # ping-pong slot holding f_h
    roff = pl.multiple_of(read_slot * n_pad + s * tk, 128)
    partial = jnp.dot(a_ref[...], cur_ref[pl.ds(roff, tk), :],
                      preferred_element_type=jnp.float32)

    @pl.when(s == 0)
    def _first_panel():                                  # direct write: no zero + RMW pass
        mm_ref[...] = partial

    @pl.when(s != 0)
    def _next_panel():
        mm_ref[...] += partial

    # End of the src reduction: commit f_{h+1}[d] and fold it into acc[d].
    @pl.when(s == ns - 1)
    def _finalize():
        new = mm_ref[...]
        write_slot = h & 1                               # slot receiving f_{h+1}
        woff = pl.multiple_of(write_slot * n_pad + d * tile_d, 128)
        cur_ref[pl.ds(woff, tile_d), :] = new.astype(cur_ref.dtype)

        aoff = pl.multiple_of(d * tile_d, 128)
        acc_ref[pl.ds(aoff, tile_d), :] = (acc_ref[pl.ds(aoff, tile_d), :]
                                           + alpha_ref[h + 1] * new)

    # Project only once, after the final hop, when acc[d] is complete. Intermediate hops
    # leave the out buffer untouched; any stale writeback they trigger is overwritten by
    # the last hop's write (the grid runs sequentially on one core).
    @pl.when((s == ns - 1) & (h == last_hop))
    def _project():
        aoff = pl.multiple_of(d * tile_d, 128)
        acc_tile = acc_ref[pl.ds(aoff, tile_d), :].astype(jnp.bfloat16)
        out_ref[...] = (jnp.dot(acc_tile, w_ref[...],
                                preferred_element_type=jnp.float32)
                        + b_ref[...]).astype(out_ref.dtype)


def build_normalized_adjacency(adj, n_pad):
    """A_hat = D^-1/2 A D^-1/2 (in-degrees, clamped at 1), zero-padded, bf16.

    Depends only on the (static) graph; cache the result across forward calls instead of
    rebuilding it every time (it is O(N^2) HBM traffic, comparable to one full hop).
    """
    n = adj.shape[0]
    adj = adj.astype(jnp.float32)
    deg = jnp.maximum(jnp.sum(adj, axis=1, keepdims=True), 1.0)   # in-degrees, (N, 1)
    norm = deg ** -0.5
    a_hat = (norm * adj) * norm.reshape(1, n)
    return jnp.pad(a_hat, ((0, n_pad - n), (0, n_pad - n))).astype(jnp.bfloat16)


def lgconv_forward(adj, feat, weight, bias, alphas, k):
    """adj: (N, N) dense adjacency with adj[dst, src] = 1 for edge src->dst."""
    assert k >= 1, "LGConv requires k >= 1 (reset_parameters divides by sqrt(k))."
    n, fin = feat.shape
    fout, fin2 = weight.shape
    assert fin2 == fin

    fi_pad = _round_up(fin, 128)
    fo_pad = _round_up(fout, 128)

    # ---- Generation-aware tiling -----------------------------------------------------
    vmem_cap = _vmem_capacity_bytes()
    tile_d = min(512, _round_up(n, 128))            # dst rows per A panel
    n_pad = _round_up(n, tile_d)

    resident_bytes = (
        2 * n_pad * fi_pad * 2          # cur ping-pong scratch (bf16)
        + n_pad * fi_pad * 4            # acc scratch (f32)
        + tile_d * fi_pad * 4           # mm partial scratch (f32)
        + 2 * fi_pad * fo_pad * 2       # W^T (bf16, default double buffer)
        + 2 * 8 * fo_pad * 4            # bias (double buffer, sublane-padded estimate)
        + 2 * tile_d * fo_pad * 4       # output tile double buffer (f32)
    )
    headroom = 4 << 20                  # Mosaic internal scratch / slack
    panel_budget = int(vmem_cap * 0.8) - resident_bytes - headroom
    # TODO(synk): if resident_bytes alone outgrows VMEM (very large N), tile the node axis
    # of cur/acc (or keep acc in bf16) instead of relying on the clamp below.
    units = n_pad // 128
    tk_units = max(1, min(units, panel_budget // (4 * tile_d * 128)))
    while units % tk_units != 0:        # TK must evenly divide N_pad
        tk_units -= 1
    tk = tk_units * 128

    nd = n_pad // tile_d
    ns = n_pad // tk

    vmem_limit = int(min(max(resident_bytes + 4 * tile_d * tk + headroom, 16 << 20),
                         int(vmem_cap * 0.9)))

    # ---- Operand preparation (A_hat is cacheable for a static graph) ------------------
    a_hat = build_normalized_adjacency(adj, n_pad)
    feat_p = jnp.pad(feat.astype(jnp.float32),
                     ((0, n_pad - n), (0, fi_pad - fin))).astype(jnp.bfloat16)
    w_t = jnp.pad(weight.astype(jnp.float32).T,
                  ((0, fi_pad - fin), (0, fo_pad - fout))).astype(jnp.bfloat16)
    b_p = jnp.pad((jnp.float32(k + 1) * bias.astype(jnp.float32)).reshape(1, fout),
                  ((0, 0), (0, fo_pad - fout)))     # bias pre-scaled by (k+1)
    alphas = alphas.astype(jnp.float32).reshape(k + 1)

    out = pl.pallas_call(
        _lgconv_kernel,
        grid=(k, nd, ns),
        in_specs=[
            pl.BlockSpec(memory_space=pltpu.MemorySpace.SMEM),          # alphas
            pl.BlockSpec((tile_d, tk), lambda h, d, s: (d, s)),         # A_hat row panels
            pl.BlockSpec((fi_pad, fo_pad), lambda h, d, s: (0, 0)),     # W^T (resident)
            pl.BlockSpec((1, fo_pad), lambda h, d, s: (0, 0)),          # bias (resident)
            pl.BlockSpec(memory_space=pl.ANY),                          # feat (raw HBM)
        ],
        out_specs=pl.BlockSpec((tile_d, fo_pad), lambda h, d, s: (d, 0)),
        out_shape=jax.ShapeDtypeStruct((n_pad, fo_pad), jnp.float32),
        scratch_shapes=[
            pltpu.VMEM((2 * n_pad, fi_pad), jnp.bfloat16),   # f_h / f_{h+1} ping-pong
            pltpu.VMEM((n_pad, fi_pad), jnp.float32),        # sum_i alpha_i f_i
            pltpu.VMEM((tile_d, fi_pad), jnp.float32),       # per-tile matmul partial
            pltpu.SemaphoreType.DMA,                         # one-time feat copy
        ],
        compiler_params=pltpu.CompilerParams(
            # All "arbitrary": hops carry a cross-dst-tile dependency through shared scratch.
            dimension_semantics=("arbitrary", "arbitrary", "arbitrary"),
            vmem_limit_bytes=vmem_limit,
        ),
    )(alphas, a_hat, w_t, b_p, feat_p)
    return out[:n, :fout]


def _reference(adj, feat, weight, bias, alphas, k):
    degs = jnp.maximum(jnp.sum(adj, axis=1, keepdims=True), 1.0)
    norm = degs ** -0.5
    feats = [feat]
    cur = feat
    for _ in range(k):
        cur = (adj @ (cur * norm)) * norm
        feats.append(cur)
    result = 0.0
    for i, f in enumerate(feats):
        result = result + ((alphas[i] * f) @ weight.T + bias)
    return result


if __name__ == "__main__":
    # Small shapes, but enough nodes to exercise the streaming/padding paths.
    N, IN_FEATURES, OUT_FEATURES, K = 384, 16, 32, 2

    key = jax.random.PRNGKey(0)
    k_adj, k_feat, k_w, k_b, k_alpha = jax.random.split(key, 5)

    # Random sparse-ish directed graph as a dense adjacency (A[dst, src]).
    adj = (jax.random.uniform(k_adj, (N, N)) < 0.1).astype(jnp.float32)
    feat = jax.random.normal(k_feat, (N, IN_FEATURES), dtype=jnp.float32)

    # Parameter init mirroring reset_parameters() (bias perturbed to exercise its path).
    stdv = 1.0 / math.sqrt(OUT_FEATURES)
    weight = jax.random.uniform(
        k_w, (OUT_FEATURES, IN_FEATURES), minval=-stdv, maxval=stdv, dtype=jnp.float32)
    bias = 0.1 * jax.random.normal(k_b, (OUT_FEATURES,), dtype=jnp.float32)
    stdvk = 1.0 / math.sqrt(K)
    alphas = jax.random.uniform(
        k_alpha, (K + 1,), minval=-stdvk, maxval=stdvk, dtype=jnp.float32)

    out = lgconv_forward(adj, feat, weight, bias, alphas, K)
    out = jax.block_until_ready(out)

    ref = _reference(adj, feat, weight, bias, alphas, K)
    assert out.shape == (N, OUT_FEATURES)
    # bf16 adjacency/features/projection (perf choice) => slightly loosened tolerance.
    assert jnp.allclose(out, ref, atol=3e-2, rtol=3e-2), float(
        jnp.max(jnp.abs(out - ref)))

    print("KERNEL_OK")
</pallas_src>

<mosaic_0001>
module attributes {stable_mosaic.version = 11 : i64} {
  func.func @_lgconv_kernel(%arg0: i32, %arg1: i32, %arg2: i32, %arg3: memref<3xf32, #tpu.memory_space<smem>>, %arg4: memref<384x384xbf16, #tpu.memory_space<vmem>>, %arg5: memref<128x128xbf16, #tpu.memory_space<vmem>>, %arg6: memref<1x128xf32, #tpu.memory_space<vmem>>, %arg7: memref<384x128xbf16, #tpu.memory_space<any>>, %arg8: memref<384x128xf32, #tpu.memory_space<vmem>>, %arg9: memref<768x128xbf16, #tpu.memory_space<vmem>>, %arg10: memref<384x128xf32, #tpu.memory_space<vmem>>, %arg11: memref<384x128xf32, #tpu.memory_space<vmem>>, %arg12: memref<!tpu.dma_semaphore, #tpu.memory_space<semaphore_mem>>) attributes {dimension_semantics = [#tpu.dimension_semantics<arbitrary>, #tpu.dimension_semantics<arbitrary>, #tpu.dimension_semantics<arbitrary>], iteration_bounds = array<i64: 2, 1, 1>, scalar_prefetch = 0 : i64, scratch_operands = 4 : i64, tpu.core_type = #tpu.core_type<tc>, window_params = [{transform_indices = @transform_0, window_bounds = array<i64: 3>}, {transform_indices = @transform_1, window_bounds = array<i64: 384, 384>}, {pipeline_mode = #tpu.pipeline_mode<synchronous>, transform_indices = @transform_2, window_bounds = array<i64: 128, 128>}, {pipeline_mode = #tpu.pipeline_mode<synchronous>, transform_indices = @transform_3, window_bounds = array<i64: 1, 128>}, {}, {transform_indices = @transform_5, window_bounds = array<i64: 384, 128>}]} {
    %c0_i32 = arith.constant 0 : i32
    %0 = arith.cmpi eq, %arg0, %c0_i32 : i32
    %c0_i32_0 = arith.constant 0 : i32
    %1 = arith.cmpi eq, %arg1, %c0_i32_0 : i32
    %2 = arith.andi %0, %1 : i1
    %c0_i32_1 = arith.constant 0 : i32
    %3 = arith.cmpi eq, %arg2, %c0_i32_1 : i32
    %4 = arith.andi %2, %3 : i1
    %5 = arith.extui %4 : i1 to i32
    %c0_i32_2 = arith.constant 0 : i32
    %6 = arith.cmpi ne, %5, %c0_i32_2 : i32
    scf.if %6 {
      %c384_i32_16 = arith.constant 384 : i32
      %c0_i32_17 = arith.constant 0 : i32
      %31 = tpu.memref_slice %arg9[%c384_i32_16, %c0_i32_17] : memref<768x128xbf16, #tpu.memory_space<vmem>> -> memref<384x128xbf16, #tpu.memory_space<vmem>>
      tpu.enqueue_dma source(%arg7 : memref<384x128xbf16, #tpu.memory_space<any>>) target(%31 : memref<384x128xbf16, #tpu.memory_space<vmem>>) target_semaphore(%arg12 : memref<!tpu.dma_semaphore, #tpu.memory_space<semaphore_mem>>)
      %c384_i32_18 = arith.constant 384 : i32
      %c0_i32_19 = arith.constant 0 : i32
      %32 = tpu.memref_slice %arg9[%c384_i32_18, %c0_i32_19] : memref<768x128xbf16, #tpu.memory_space<vmem>> -> memref<384x128xbf16, #tpu.memory_space<vmem>>
      tpu.wait_dma2 semaphore(%arg12 : memref<!tpu.dma_semaphore, #tpu.memory_space<semaphore_mem>>) src(%arg7 : memref<384x128xbf16, #tpu.memory_space<any>>) dst(%32 : memref<384x128xbf16, #tpu.memory_space<vmem>>)
      %c0_20 = arith.constant 0 : index
      %33 = memref.load %arg3[%c0_20] : memref<3xf32, #tpu.memory_space<smem>>
      %c384 = arith.constant 384 : index
      %c0_21 = arith.constant 0 : index
      %34 = vector.load %arg9[%c384, %c0_21] : memref<768x128xbf16, #tpu.memory_space<vmem>>, vector<384x128xbf16>
      %35 = arith.extf %34 : vector<384x128xbf16> to vector<384x128xf32>
      %36 = vector.broadcast %33 : f32 to vector<384x128xf32>
      %37 = arith.mulf %36, %35 : vector<384x128xf32>
      %c0_22 = arith.constant 0 : index
      %c0_23 = arith.constant 0 : index
      %38 = vector.load %arg10[%c0_22, %c0_23] : memref<384x128xf32, #tpu.memory_space<vmem>>, vector<384x128xf32>
      tpu.vector_store %arg10[%c0_22, %c0_23], %37 {strides = array<i32>} : memref<384x128xf32, #tpu.memory_space<vmem>>, vector<384x128xf32>,
    } else {
    }
    %c1_i32 = arith.constant 1 : i32
    %7 = arith.addi %arg0, %c1_i32 : i32
    %c1_i32_3 = arith.constant 1 : i32
    %8 = arith.andi %7, %c1_i32_3 : i32
    %c384_i32 = arith.constant 384 : i32
    %9 = arith.muli %8, %c384_i32 : i32
    %c384_i32_4 = arith.constant 384 : i32
    %10 = arith.muli %arg2, %c384_i32_4 : i32
    %11 = arith.addi %9, %10 : i32
    %12 = tpu.assume_multiple %11, 128 : i32
    %c0 = arith.constant 0 : index
    %c0_5 = arith.constant 0 : index
    %13 = vector.load %arg4[%c0, %c0_5] : memref<384x384xbf16, #tpu.memory_space<vmem>>, vector<384x384xbf16>
    %14 = arith.index_cast %12 : i32 to index
    %c0_6 = arith.constant 0 : index
    %15 = vector.load %arg9[%14, %c0_6] : memref<768x128xbf16, #tpu.memory_space<vmem>>, vector<384x128xbf16>
    %cst = arith.constant dense<0.000000e+00> : vector<384x128xf32>
    %16 = tpu.matmul %13, %15, %cst {dimension_numbers = #tpu.dot_dimension_numbers<[1], [0], [0], [1], [0, 0, 1, 1], [], []>} : vector<384x384xbf16>, vector<384x128xbf16>, vector<384x128xf32> -> vector<384x128xf32>
    %c0_i32_7 = arith.constant 0 : i32
    %17 = arith.cmpi eq, %arg2, %c0_i32_7 : i32
    %18 = arith.extui %17 : i1 to i32
    %c0_i32_8 = arith.constant 0 : i32
    %19 = arith.cmpi ne, %18, %c0_i32_8 : i32
    scf.if %19 {
      %c0_16 = arith.constant 0 : index
      %c0_17 = arith.constant 0 : index
      %31 = vector.load %arg11[%c0_16, %c0_17] : memref<384x128xf32, #tpu.memory_space<vmem>>, vector<384x128xf32>
      tpu.vector_store %arg11[%c0_16, %c0_17], %16 {strides = array<i32>} : memref<384x128xf32, #tpu.memory_space<vmem>>, vector<384x128xf32>,
    } else {
    }
    %c0_i32_9 = arith.constant 0 : i32
    %20 = arith.cmpi ne, %arg2, %c0_i32_9 : i32
    %21 = arith.extui %20 : i1 to i32
    %c0_i32_10 = arith.constant 0 : i32
    %22 = arith.cmpi ne, %21, %c0_i32_10 : i32
    scf.if %22 {
      %c0_16 = arith.constant 0 : index
      %c0_17 = arith.constant 0 : index
      %31 = vector.load %arg11[%c0_16, %c0_17] : memref<384x128xf32, #tpu.memory_space<vmem>>, vector<384x128xf32>
      %32 = arith.addf %31, %16 : vector<384x128xf32>
      %c0_18 = arith.constant 0 : index
      %c0_19 = arith.constant 0 : index
      %33 = vector.load %arg11[%c0_18, %c0_19] : memref<384x128xf32, #tpu.memory_space<vmem>>, vector<384x128xf32>
      tpu.vector_store %arg11[%c0_18, %c0_19], %32 {strides = array<i32>} : memref<384x128xf32, #tpu.memory_space<vmem>>, vector<384x128xf32>,
    } else {
    }
    %c0_i32_11 = arith.constant 0 : i32
    %23 = arith.cmpi eq, %arg2, %c0_i32_11 : i32
    %24 = arith.extui %23 : i1 to i32
    %c0_i32_12 = arith.constant 0 : i32
    %25 = arith.cmpi ne, %24, %c0_i32_12 : i32
    scf.if %25 {
      %c0_16 = arith.constant 0 : index
      %c0_17 = arith.constant 0 : index
      %31 = vector.load %arg11[%c0_16, %c0_17] : memref<384x128xf32, #tpu.memory_space<vmem>>, vector<384x128xf32>
      %c1_i32_18 = arith.constant 1 : i32
      %32 = arith.andi %arg0, %c1_i32_18 : i32
      %c384_i32_19 = arith.constant 384 : i32
      %33 = arith.muli %32, %c384_i32_19 : i32
      %c384_i32_20 = arith.constant 384 : i32
      %34 = arith.muli %arg1, %c384_i32_20 : i32
      %35 = arith.addi %33, %34 : i32
      %36 = tpu.assume_multiple %35, 128 : i32
      %37 = arith.truncf %31 : vector<384x128xf32> to vector<384x128xbf16>
      %38 = arith.index_cast %36 : i32 to index
      %c0_21 = arith.constant 0 : index
      %39 = vector.load %arg9[%38, %c0_21] : memref<768x128xbf16, #tpu.memory_space<vmem>>, vector<384x128xbf16>
      tpu.vector_store %arg9[%38, %c0_21], %37 {strides = array<i32>} : memref<768x128xbf16, #tpu.memory_space<vmem>>, vector<384x128xbf16>,
      %c384_i32_22 = arith.constant 384 : i32
      %40 = arith.muli %arg1, %c384_i32_22 : i32
      %41 = tpu.assume_multiple %40, 128 : i32
      %42 = arith.index_cast %41 : i32 to index
      %c0_23 = arith.constant 0 : index
      %43 = vector.load %arg10[%42, %c0_23] : memref<384x128xf32, #tpu.memory_space<vmem>>, vector<384x128xf32>
      %c1_i32_24 = arith.constant 1 : i32
      %44 = arith.addi %arg0, %c1_i32_24 : i32
      %45 = arith.index_cast %44 : i32 to index
      %46 = memref.load %arg3[%45] : memref<3xf32, #tpu.memory_space<smem>>
      %47 = vector.broadcast %46 : f32 to vector<384x128xf32>
      %48 = arith.mulf %47, %31 : vector<384x128xf32>
      %49 = arith.addf %43, %48 : vector<384x128xf32>
      %50 = arith.index_cast %41 : i32 to index
      %c0_25 = arith.constant 0 : index
      %51 = vector.load %arg10[%50, %c0_25] : memref<384x128xf32, #tpu.memory_space<vmem>>, vector<384x128xf32>
      tpu.vector_store %arg10[%50, %c0_25], %49 {strides = array<i32>} : memref<384x128xf32, #tpu.memory_space<vmem>>, vector<384x128xf32>,
    } else {
    }
    %c0_i32_13 = arith.constant 0 : i32
    %26 = arith.cmpi eq, %arg2, %c0_i32_13 : i32
    %c1_i32_14 = arith.constant 1 : i32
    %27 = arith.cmpi eq, %arg0, %c1_i32_14 : i32
    %28 = arith.andi %26, %27 : i1
    %29 = arith.extui %28 : i1 to i32
    %c0_i32_15 = arith.constant 0 : i32
    %30 = arith.cmpi ne, %29, %c0_i32_15 : i32
    scf.if %30 {
      %c384_i32_16 = arith.constant 384 : i32
      %31 = arith.muli %arg1, %c384_i32_16 : i32
      %32 = tpu.assume_multiple %31, 128 : i32
      %33 = arith.index_cast %32 : i32 to index
      %c0_17 = arith.constant 0 : index
      %34 = vector.load %arg10[%33, %c0_17] : memref<384x128xf32, #tpu.memory_space<vmem>>, vector<384x128xf32>
      %35 = arith.truncf %34 : vector<384x128xf32> to vector<384x128xbf16>
      %c0_18 = arith.constant 0 : index
      %c0_19 = arith.constant 0 : index
      %36 = vector.load %arg5[%c0_18, %c0_19] : memref<128x128xbf16, #tpu.memory_space<vmem>>, vector<128x128xbf16>
      %cst_20 = arith.constant dense<0.000000e+00> : vector<384x128xf32>
      %37 = tpu.matmul %35, %36, %cst_20 {dimension_numbers = #tpu.dot_dimension_numbers<[1], [0], [0], [1], [0, 0, 1, 1], [], []>} : vector<384x128xbf16>, vector<128x128xbf16>, vector<384x128xf32> -> vector<384x128xf32>
      %c0_21 = arith.constant 0 : index
      %c0_22 = arith.constant 0 : index
      %38 = vector.load %arg6[%c0_21, %c0_22] : memref<1x128xf32, #tpu.memory_space<vmem>>, vector<1x128xf32>
      %39 = vector.broadcast %38 : vector<1x128xf32> to vector<384x128xf32>
      %40 = arith.addf %37, %39 : vector<384x128xf32>
      %c0_23 = arith.constant 0 : index
      %c0_24 = arith.constant 0 : index
      %41 = vector.load %arg8[%c0_23, %c0_24] : memref<384x128xf32, #tpu.memory_space<vmem>>, vector<384x128xf32>
      tpu.vector_store %arg8[%c0_23, %c0_24], %40 {strides = array<i32>} : memref<384x128xf32, #tpu.memory_space<vmem>>, vector<384x128xf32>,
    } else {
    }
    return
  }
  func.func @transform_0(%arg0: i32, %arg1: i32, %arg2: i32) -> i32 {
    %c0_i32 = arith.constant 0 : i32
    %c0_i32_0 = arith.constant 0 : i32
    return %c0_i32 : i32
  }
  func.func @transform_1(%arg0: i32, %arg1: i32, %arg2: i32) -> (i32, i32) {
    %c0_i32 = arith.constant 0 : i32
    return %arg1, %arg2 : i32, i32
  }
  func.func @transform_2(%arg0: i32, %arg1: i32, %arg2: i32) -> (i32, i32) {
    %c0_i32 = arith.constant 0 : i32
    %c0_i32_0 = arith.constant 0 : i32
    %c0_i32_1 = arith.constant 0 : i32
    return %c0_i32, %c0_i32_0 : i32, i32
  }
  func.func @transform_3(%arg0: i32, %arg1: i32, %arg2: i32) -> (i32, i32) {
    %c0_i32 = arith.constant 0 : i32
    %c0_i32_0 = arith.constant 0 : i32
    %c0_i32_1 = arith.constant 0 : i32
    return %c0_i32, %c0_i32_0 : i32, i32
  }
  func.func @transform_5(%arg0: i32, %arg1: i32, %arg2: i32) -> (i32, i32) {
    %c0_i32 = arith.constant 0 : i32
    %c0_i32_0 = arith.constant 0 : i32
    return %arg1, %c0_i32 : i32, i32
  }
}

</mosaic_0001>

<llo_original>
// kernel: tpu_custom_call.1
$region0: #{tpu_custom_call.1}
  #allocation0 [shape = 'u32[]', space=smem, size = 0x4, offset = 0x4, fixed_abs, tag = 'smem constant byte address 0x4 - core index']
  #allocation1 [shape = 'u32[144,128]{1,0:T(1,128)}', space=vmem, size = 0x12000, scoped, tag = 'internal scratch']
  #allocation2 [shape = 'bf16[768,128]{1,0:T(16,128)(2,1)}', space=vmem, size = 0x30000, scoped, tag = 'scratch operand']
  #allocation3 [shape = 'f32[384,128]{1,0:T(8,128)}', space=vmem, size = 0x30000, scoped, tag = 'scratch operand']
  #allocation4 [shape = 'f32[384,128]{1,0:T(8,128)}', space=vmem, size = 0x30000, scoped, tag = 'scratch operand']
  #allocation5 [shape = 's32[1]{0}', space=sflag, size = 0x4, scoped, tag = 'scratch operand']
  #allocation14 [shape = 's32[]', space=sflag, size = 0x4, offset = 0, fixed_abs, tag = 'sflag constant byte address 0x0 - dummy sync flag']
  #allocation15 [shape = 's32[]', space=sflag, size = 0x4, offset = 0, fixed_abs, tag = 'sflag constant byte address 0x0 - dummy sync flag']
  #allocation16 [shape = 'u32[]', space=smem, size = 0x4, offset = 0x44, fixed_abs, tag = 'smem constant byte address 0x44 - assertion arg 0']
  #allocation17 [shape = 'u32[]', space=smem, size = 0x4, offset = 0x48, fixed_abs, tag = 'smem constant byte address 0x48 - assertion arg 1']
  %s0 = inlined_call_operand.hbm [shape: f32[3], index: 0, kind: input, shape index: {}]
  %s1 = inlined_call_operand.hbm [shape: bf16[384,384], index: 1, kind: input, shape index: {}]
  %s2 = inlined_call_operand.hbm [shape: bf16[128,128], index: 2, kind: input, shape index: {}]
  %s3 = inlined_call_operand.vmem [shape: f32[1,128], index: 3, kind: input, shape index: {}]
  %s4 = inlined_call_operand.hbm [shape: bf16[384,128], index: 4, kind: input, shape index: {}]
  %s5 = inlined_call_operand.hbm [shape: f32[384,128], index: 5, kind: output, shape index: {}]
  %s6 = sld [smem:[#allocation0]]
  $region85: #{tpu_custom_call.1} parent=0
    _
  %s8 = ssub.s32 1, %s6
  %s9 = scalar_select 0, %s8, %s6
  $region1: #{tpu_custom_call.1} parent=0
    #allocation6 [shape = 'u8[512]{0}', space=smem, size = 0x200, scoped, tag = 'input window, operand 0, single buffered']
    #allocation7 [shape = 's32[2]{0}', space=sflag, size = 0x8, scoped, tag = 'scoped memory for tpu_custom_call.1']
    #allocation8 [shape = 's32[2]{0}', space=sflag, size = 0x8, scoped, tag = 'scoped memory for tpu_custom_call.1']
    #allocation9 [shape = 's32[2]{0}', space=sflag, size = 0x8, scoped, tag = 'scoped memory for tpu_custom_call.1']
    #allocation10 [shape = 'u8[294912]{0}', space=vmem, size = 0x48000, scoped, tag = 'input window, operand 1, single buffered']
    #allocation11 [shape = 'u8[32768]{0}', space=vmem, size = 0x8000, scoped, tag = 'input window, operand 2, single buffered']
    #allocation12 [shape = 's32[1]{0}', space=sflag, size = 0x4, scoped, tag = 'scoped memory for tpu_custom_call.1']
    #allocation13 [shape = 'u8[196608]{0}', space=vmem, size = 0x30000, scoped, tag = 'output window, operand 0, single buffered']
    %10 = vsyncpa [#allocation9], 0
    %11 = vsyncpa [#allocation7], 0
    %12 = vsyncpa [#allocation12], 0
    %13 = vsyncpa [#allocation8], 0
    loop: start=0, step=1, limit=4
    $region2: #{tpu_custom_call.1} parent=1 // loop_pre_header
      _
    $region3: #{tpu_custom_call.1} parent=1 // loop_header
      %s15 = sphi 0, %s19
      %p16 = scmp.ge.s32.totalorder %s15, 4
      %s22 = sphi 0, %s41
      %s23 = sphi 0, %s37
      %s24 = sphi 0, %s33
      %s25 = sphi 0, %s22
      %s26 = sphi 0, %s23
      %s27 = sphi 0, %s24
      %s28 = sphi 0, %s25
      %s29 = sphi 0, %s26
      %s30 = sphi 0, %s27
      %s42 = sphi 0, %s42
      %s44 = sphi 0, %s42
      %s45 = sphi 0, %s44
      %s59 = sphi 0, %s45
      %s67 = sphi 0, %s69
      %s70 = sphi 0, %s67
      %s71 = sphi 0, %s70
      %s87 = sphi 0, %s71
      %s91 = sphi 0, %s91
      %s93 = sphi 0, %s91
      %s94 = sphi 0, %s93
      %s108 = sphi 0, %s94
      %s112 = sphi 0, %s112
      %s114 = sphi 0, %s112
      %s115 = sphi 0, %s114
      %s129 = sphi 0, %s115
      %s135 = sphi 0, %s137
      %s138 = sphi 0, %s135
      %s139 = sphi 0, %s138
      %s155 = sphi 0, %s139
    $region4: #{tpu_custom_call.1} parent=1 // loop_header_branch
      %18 = sbr.rel (%p16) target = $region8
    $region5: #{tpu_custom_call.1} parent=1 // loop_body
      %s20 = ssub.s32 %s15, 1
      %s21 = ssub.s32 %s15, 2
      %s31 = sadd.s32 1, %s24
      %p32 = scmp.ge.s32.totalorder %s31, 1
      %s33 = scalar_select %p32, 0, %s31
      %s34 = sadd.s32 1, %s23
      %s35 = scalar_select %p32, %s34, %s23
      %p36 = scmp.ge.s32.totalorder %s35, 1
      %s37 = scalar_select %p36, 0, %s35
      %s38 = sadd.s32 1, %s22
      %s39 = scalar_select %p36, %s38, %s22
      %p40 = scmp.ge.s32.totalorder %s39, 2
      %s41 = scalar_select %p40, 0, %s39
      %s43 = sadd.s32 %s42, 1
      %p46 = scmp.eq.s32.totalorder %s15, 1
      %p47 = scmp.ne.s32.totalorder %s42, %s44
      %p48 = scmp.eq.s32.totalorder %s15, 0
      %p49 = por %p47, %p48
      %p50 = scmp.ne.s32.totalorder %s42, %s44
      %p51 = scmp.eq.s32.totalorder %s20, 1
      %p52 = por %p50, %p51
      %p53 = scmp.ne.s32.totalorder %s44, %s45
      %p54 = scmp.eq.s32.totalorder %s20, 0
      %p55 = por %p53, %p54
      %p56 = scmp.ne.s32.totalorder %s44, %s45
      %p57 = scmp.eq.s32.totalorder %s21, 1
      %p58 = por %p56, %p57
      %p60 = scmp.ne.s32.totalorder %s45, %s59
      %p61 = scmp.eq.s32.totalorder %s21, 0
      %p62 = por %p60, %p61
      %s63 = ssub.s32 %s23, %s37
      %s64 = ssub.s32 %s24, %s33
      %s65 = sor.u32 %s63, %s64
      %p66 = scmp.eq.s32.totalorder %s65, 0
      %s68 = sadd.s32 %s67, 1
      %s69 = scalar_select %p66, %s67, %s68
      %p72 = pneg %p66
      %p73 = scmp.eq.s32.totalorder %s15, 1
      %p74 = por %p72, %p73
      %p75 = scmp.ne.s32.totalorder %s67, %s70
      %p76 = scmp.eq.s32.totalorder %s15, 0
      %p77 = por %p75, %p76
      %p78 = scmp.ne.s32.totalorder %s67, %s70
      %p79 = scmp.eq.s32.totalorder %s20, 1
      %p80 = por %p78, %p79
      %p81 = scmp.ne.s32.totalorder %s70, %s71
      %p82 = scmp.eq.s32.totalorder %s20, 0
      %p83 = por %p81, %p82
      %p84 = scmp.ne.s32.totalorder %s70, %s71
      %p85 = scmp.eq.s32.totalorder %s21, 1
      %p86 = por %p84, %p85
      %p88 = scmp.ne.s32.totalorder %s71, %s87
      %p89 = scmp.eq.s32.totalorder %s21, 0
      %p90 = por %p88, %p89
      %s92 = sadd.s32 %s91, 1
      %p95 = scmp.eq.s32.totalorder %s15, 1
      %p96 = scmp.ne.s32.totalorder %s91, %s93
      %p97 = scmp.eq.s32.totalorder %s15, 0
      %p98 = por %p96, %p97
      %p99 = scmp.ne.s32.totalorder %s91, %s93
      %p100 = scmp.eq.s32.totalorder %s20, 1
      %p101 = por %p99, %p100
      %p102 = scmp.ne.s32.totalorder %s93, %s94
      %p103 = scmp.eq.s32.totalorder %s20, 0
      %p104 = por %p102, %p103
      %p105 = scmp.ne.s32.totalorder %s93, %s94
      %p106 = scmp.eq.s32.totalorder %s21, 1
      %p107 = por %p105, %p106
      %p109 = scmp.ne.s32.totalorder %s94, %s108
      %p110 = scmp.eq.s32.totalorder %s21, 0
      %p111 = por %p109, %p110
      %s113 = sadd.s32 %s112, 1
      %p116 = scmp.eq.s32.totalorder %s15, 1
      %p117 = scmp.ne.s32.totalorder %s112, %s114
      %p118 = scmp.eq.s32.totalorder %s15, 0
      %p119 = por %p117, %p118
      %p120 = scmp.ne.s32.totalorder %s112, %s114
      %p121 = scmp.eq.s32.totalorder %s20, 1
      %p122 = por %p120, %p121
      %p123 = scmp.ne.s32.totalorder %s114, %s115
      %p124 = scmp.eq.s32.totalorder %s20, 0
      %p125 = por %p123, %p124
      %p126 = scmp.ne.s32.totalorder %s114, %s115
      %p127 = scmp.eq.s32.totalorder %s21, 1
      %p128 = por %p126, %p127
      %p130 = scmp.ne.s32.totalorder %s115, %s129
      %p131 = scmp.eq.s32.totalorder %s21, 0
      %p132 = por %p130, %p131
      %s133 = ssub.s32 %s23, %s37
      %p134 = scmp.eq.s32.totalorder %s133, 0
      %s136 = sadd.s32 %s135, 1
      %s137 = scalar_select %p134, %s135, %s136
      %p140 = pneg %p134
      %p141 = scmp.eq.s32.totalorder %s15, 1
      %p142 = por %p140, %p141
      %p143 = scmp.ne.s32.totalorder %s135, %s138
      %p144 = scmp.eq.s32.totalorder %s15, 0
      %p145 = por %p143, %p144
      %p146 = scmp.ne.s32.totalorder %s135, %s138
      %p147 = scmp.eq.s32.totalorder %s20, 1
      %p148 = por %p146, %p147
      %p149 = scmp.ne.s32.totalorder %s138, %s139
      %p150 = scmp.eq.s32.totalorder %s20, 0
      %p151 = por %p149, %p150
      %p152 = scmp.ne.s32.totalorder %s138, %s139
      %p153 = scmp.eq.s32.totalorder %s21, 1
      %p154 = por %p152, %p153
      %p156 = scmp.ne.s32.totalorder %s139, %s155
      %p157 = scmp.eq.s32.totalorder %s21, 0
      %p158 = por %p156, %p157
      %p159 = scmp.le.s32.totalorder 1, %s15
      %p160 = scmp.lt.s32.totalorder %s15, 3
      %p161 = pnand %p159, %p160
      %p162 = pneg %p161
      // Predicated region
      $region9: #{tpu_custom_call.1} parent=5 // pred_check
        _
      $region10: #{tpu_custom_call.1} parent=5 // pred_check_branch
        %164 = sbr.rel (%p161) target = $region12
      $region11: #{tpu_custom_call.1} parent=5 // pred_region
        %s165 = ssub.s32 %s15, 1
        // Predicated region
        $region13: #{tpu_custom_call.1} parent=11 // pred_check
          %p166 = pneg %p55
        $region14: #{tpu_custom_call.1} parent=11 // pred_check_branch
          %168 = sbr.rel (%p166) target = $region16
        $region15: #{tpu_custom_call.1} parent=11 // pred_region
          %s170 = ssub.s32 16, 16
          %171 = vsyncadd [#allocation9], %s170
          %174 = dma.hbm_to_smem %s0, 16, [#allocation6], [#allocation9]
        $region16: #{tpu_custom_call.1} parent=11 // pred_fallthru
          _
        // Predicated region
        $region17: #{tpu_custom_call.1} parent=11 // pred_check
          %p175 = pneg %p83
        $region18: #{tpu_custom_call.1} parent=11 // pred_check_branch
          %177 = sbr.rel (%p175) target = $region20
        $region19: #{tpu_custom_call.1} parent=11 // pred_region
          %s178 = smul.u32 48, %s26
          %s179 = smul.u32 3, %s27
          %s181 = ssub.s32 9216, 9216
          %182 = vsyncadd [#allocation7], %s181
          %s183 = smul.addr %s178, 3
          %s184 = sadd.s32 %s179, %s183
          %s185 = smul.addr %s184, 64
          %s186 = scalar_lea.hbm %s1, %s185
          %s187 = sshll.u32 [#allocation10], 4
          %s188 = int_to_ptr.vmem [resolvable:$true] %s187
          %193 = dma.hbm_to_vmem [thread:$0]  %s186, 9216, %s188, [#allocation7], 192, 192, 12
        $region20: #{tpu_custom_call.1} parent=11 // pred_fallthru
          _
        // Predicated region
        $region21: #{tpu_custom_call.1} parent=11 // pred_check
          %p194 = pneg %p104
        $region22: #{tpu_custom_call.1} parent=11 // pred_check_branch
          %196 = sbr.rel (%p194) target = $region24
        $region23: #{tpu_custom_call.1} parent=11 // pred_region
          %s198 = ssub.s32 1024, 1024
          %199 = vsyncadd [#allocation12], %s198
          %s200 = sshll.u32 [#allocation11], 4
          %s201 = int_to_ptr.vmem [resolvable:$true] %s200
          %206 = dma.hbm_to_vmem [thread:$0]  %s2, 1024, %s201, [#allocation12], 64, 64, 4
        $region24: #{tpu_custom_call.1} parent=11 // pred_fallthru
          _
        // Predicated region
        $region25: #{tpu_custom_call.1} parent=11 // pred_check
          %p207 = pneg %p125
        $region26: #{tpu_custom_call.1} parent=11 // pred_check_branch
          %209 = sbr.rel (%p207) target = $region28
        $region27: #{tpu_custom_call.1} parent=11 // pred_region
          _
        $region28: #{tpu_custom_call.1} parent=11 // pred_fallthru
          _
      $region12: #{tpu_custom_call.1} parent=5 // pred_fallthru
        _
      %p210 = scmp.lt.s32.totalorder %s15, 2
      // Predicated region
      $region29: #{tpu_custom_call.1} parent=5 // pred_check
        %p211 = pneg %p210
      $region30: #{tpu_custom_call.1} parent=5 // pred_check_branch
        %213 = sbr.rel (%p211) target = $region32
      $region31: #{tpu_custom_call.1} parent=5 // pred_region
        _
      $region32: #{tpu_custom_call.1} parent=5 // pred_fallthru
        _
      %p214 = scmp.le.s32.totalorder 1, %s15
      %p215 = scmp.lt.s32.totalorder %s15, 3
      %p216 = pnand %p214, %p215
      %p217 = pneg %p216
      // Predicated region
      $region33: #{tpu_custom_call.1} parent=5 // pred_check
        _
      $region34: #{tpu_custom_call.1} parent=5 // pred_check_branch
        %219 = sbr.rel (%p216) target = $region36
      $region35: #{tpu_custom_call.1} parent=5 // pred_region
        %s220 = ssub.s32 %s15, 1
        // Predicated region
        $region37: #{tpu_custom_call.1} parent=35 // pred_check
          %p221 = pneg %p55
        $region38: #{tpu_custom_call.1} parent=35 // pred_check_branch
          %223 = sbr.rel (%p221) target = $region40
        $region39: #{tpu_custom_call.1} parent=35 // pred_region
          %224 = dma.done [#allocation9], 16
        $region40: #{tpu_custom_call.1} parent=35 // pred_fallthru
          _
        // Predicated region
        $region41: #{tpu_custom_call.1} parent=35 // pred_check
          %p225 = pneg %p83
        $region42: #{tpu_custom_call.1} parent=35 // pred_check_branch
          %227 = sbr.rel (%p225) target = $region44
        $region43: #{tpu_custom_call.1} parent=35 // pred_region
          %228 = dma.done [#allocation7], 9216
        $region44: #{tpu_custom_call.1} parent=35 // pred_fallthru
          _
        // Predicated region
        $region45: #{tpu_custom_call.1} parent=35 // pred_check
          %p229 = pneg %p104
        $region46: #{tpu_custom_call.1} parent=35 // pred_check_branch
          %231 = sbr.rel (%p229) target = $region48
        $region47: #{tpu_custom_call.1} parent=35 // pred_region
          %232 = dma.done [#allocation12], 1024
        $region48: #{tpu_custom_call.1} parent=35 // pred_fallthru
          _
        %233 = sfence
        %p234 = pneg %p55
        %p235 = pneg %p52
        %p236 = pneg %p83
        %p237 = pneg %p80
        %p238 = pneg %p104
        %p239 = pneg %p101
        %p240 = pneg %p125
        %p241 = pneg %p122
        %p242 = pneg %p151
        %p243 = pneg %p148
        %s244 = smul.u32 48, %s26
        %s245 = smul.u32 3, %s27
        %s246 = smul.u32 48, %s26
        %p248 = scmp.eq.s32.totalorder %s25, 0
        %p249 = scmp.eq.s32.totalorder %s26, 0
        %p250 = pnand %p248, %p249
        %p251 = pneg %p250
        %p252 = scmp.eq.s32.totalorder %s27, 0
        %p253 = pnand %p251, %p252
        %p254 = pneg %p253
        // Predicated region
        $region49: #{tpu_custom_call.1} parent=35 // pred_check
          _
        $region50: #{tpu_custom_call.1} parent=35 // pred_check_branch
          %256 = sbr.rel (%p253) target = $region52
        $region51: #{tpu_custom_call.1} parent=35 // pred_region
          %s257 = scalar_lea.vmem [#allocation2], 192
          // Predicated region
          $region53: #{tpu_custom_call.1} parent=51 // pred_check
            _
          $region54: #{tpu_custom_call.1} parent=51 // pred_check_branch
            %259 = sbr.rel target = $region56
          $region55: #{tpu_custom_call.1} parent=51 // pred_region
            %260 = sst [smem:[#allocation16]] [#allocation15]
            %261 = sst [smem:[#allocation17]] [#allocation14]
          $region56: #{tpu_custom_call.1} parent=51 // pred_fallthru
            _
          %263 = shalt.err (0)
          %s265 = sshll.u32 %s257, 4
          %s266 = int_to_ptr.vmem [resolvable:$true] %s265
          %268 = dma.hbm_to_vmem [thread:$0]  %s4, 3072, %s266, [#allocation5]
          %s269 = smul.u32 4, 48
          %s270 = smul.u32 %s269, 1
          %s271 = sshll.u32 %s270, 4
          %272 = dma.done [#allocation5], %s271
          %s273 = sld [smem:[#allocation6]]
          %v274 = vld [vmem:[#allocation2 + $0xc0] sm:$0xff]
          %v275 = vld [vmem:[#allocation2 + $0xc8] sm:$0xff]
          %v276 = vld [vmem:[#allocation2 + $0xd0] sm:$0xff]
          %v277 = vld [vmem:[#allocation2 + $0xd8] sm:$0xff]
          %v278 = vld [vmem:[#allocation2 + $0xe0] sm:$0xff]
          %v279 = vld [vmem:[#allocation2 + $0xe8] sm:$0xff]
          %v280 = vld [vmem:[#allocation2 + $0xf0] sm:$0xff]
          %v281 = vld [vmem:[#allocation2 + $0xf8] sm:$0xff]
          %v282 = vld [vmem:[#allocation2 + $0x100] sm:$0xff]
          %v283 = vld [vmem:[#allocation2 + $0x108] sm:$0xff]
          %v284 = vld [vmem:[#allocation2 + $0x110] sm:$0xff]
          %v285 = vld [vmem:[#allocation2 + $0x118] sm:$0xff]
          %v286 = vld [vmem:[#allocation2 + $0x120] sm:$0xff]
          %v287 = vld [vmem:[#allocation2 + $0x128] sm:$0xff]
          %v288 = vld [vmem:[#allocation2 + $0x130] sm:$0xff]
          %v289 = vld [vmem:[#allocation2 + $0x138] sm:$0xff]
          %v290 = vld [vmem:[#allocation2 + $0x140] sm:$0xff]
          %v291 = vld [vmem:[#allocation2 + $0x148] sm:$0xff]
          %v292 = vld [vmem:[#allocation2 + $0x150] sm:$0xff]
          %v293 = vld [vmem:[#allocation2 + $0x158] sm:$0xff]
          %v294 = vld [vmem:[#allocation2 + $0x160] sm:$0xff]
          %v295 = vld [vmem:[#allocation2 + $0x168] sm:$0xff]
          %v296 = vld [vmem:[#allocation2 + $0x170] sm:$0xff]
          %v297 = vld [vmem:[#allocation2 + $0x178] sm:$0xff]
          %v298 = vunpack.c.l.bf16 %v274
          %v299 = vunpack.c.h.bf16 %v274
          %v300 = vunpack.c.l.bf16 %v275
          %v301 = vunpack.c.h.bf16 %v275
          %v302 = vunpack.c.l.bf16 %v276
          %v303 = vunpack.c.h.bf16 %v276
          %v304 = vunpack.c.l.bf16 %v277
          %v305 = vunpack.c.h.bf16 %v277
          %v306 = vunpack.c.l.bf16 %v278
          %v307 = vunpack.c.h.bf16 %v278
          %v308 = vunpack.c.l.bf16 %v279
          %v309 = vunpack.c.h.bf16 %v279
          %v310 = vunpack.c.l.bf16 %v280
          %v311 = vunpack.c.h.bf16 %v280
          %v312 = vunpack.c.l.bf16 %v281
          %v313 = vunpack.c.h.bf16 %v281
          %v314 = vunpack.c.l.bf16 %v282
          %v315 = vunpack.c.h.bf16 %v282
          %v316 = vunpack.c.l.bf16 %v283
          %v317 = vunpack.c.h.bf16 %v283
          %v318 = vunpack.c.l.bf16 %v284
          %v319 = vunpack.c.h.bf16 %v284
          %v320 = vunpack.c.l.bf16 %v285
          %v321 = vunpack.c.h.bf16 %v285
          %v322 = vunpack.c.l.bf16 %v286
          %v323 = vunpack.c.h.bf16 %v286
          %v324 = vunpack.c.l.bf16 %v287
          %v325 = vunpack.c.h.bf16 %v287
          %v326 = vunpack.c.l.bf16 %v288
          %v327 = vunpack.c.h.bf16 %v288
          %v328 = vunpack.c.l.bf16 %v289
          %v329 = vunpack.c.h.bf16 %v289
          %v330 = vunpack.c.l.bf16 %v290
          %v331 = vunpack.c.h.bf16 %v290
          %v332 = vunpack.c.l.bf16 %v291
          %v333 = vunpack.c.h.bf16 %v291
          %v334 = vunpack.c.l.bf16 %v292
          %v335 = vunpack.c.h.bf16 %v292
          %v336 = vunpack.c.l.bf16 %v293
          %v337 = vunpack.c.h.bf16 %v293
          %v338 = vunpack.c.l.bf16 %v294
          %v339 = vunpack.c.h.bf16 %v294
          %v340 = vunpack.c.l.bf16 %v295
          %v341 = vunpack.c.h.bf16 %v295
          %v342 = vunpack.c.l.bf16 %v296
          %v343 = vunpack.c.h.bf16 %v296
          %v344 = vunpack.c.l.bf16 %v297
          %v345 = vunpack.c.h.bf16 %v297
          %v346 = vstv %s273
          %v347 = vmul.f32 %v346, %v298
          %v348 = vmul.f32 %v346, %v299
          %v349 = vmul.f32 %v346, %v300
          %v350 = vmul.f32 %v346, %v301
          %v351 = vmul.f32 %v346, %v302
          %v352 = vmul.f32 %v346, %v303
          %v353 = vmul.f32 %v346, %v304
          %v354 = vmul.f32 %v346, %v305
          %v355 = vmul.f32 %v346, %v306
          %v356 = vmul.f32 %v346, %v307
          %v357 = vmul.f32 %v346, %v308
          %v358 = vmul.f32 %v346, %v309
          %v359 = vmul.f32 %v346, %v310
          %v360 = vmul.f32 %v346, %v311
          %v361 = vmul.f32 %v346, %v312
          %v362 = vmul.f32 %v346, %v313
          %v363 = vmul.f32 %v346, %v314
          %v364 = vmul.f32 %v346, %v315
          %v365 = vmul.f32 %v346, %v316
          %v366 = vmul.f32 %v346, %v317
          %v367 = vmul.f32 %v346, %v318
          %v368 = vmul.f32 %v346, %v319
          %v369 = vmul.f32 %v346, %v320
          %v370 = vmul.f32 %v346, %v321
          %v371 = vmul.f32 %v346, %v322
          %v372 = vmul.f32 %v346, %v323
          %v373 = vmul.f32 %v346, %v324
          %v374 = vmul.f32 %v346, %v325
          %v375 = vmul.f32 %v346, %v326
          %v376 = vmul.f32 %v346, %v327
          %v377 = vmul.f32 %v346, %v328
          %v378 = vmul.f32 %v346, %v329
          %v379 = vmul.f32 %v346, %v330
          %v380 = vmul.f32 %v346, %v331
          %v381 = vmul.f32 %v346, %v332
          %v382 = vmul.f32 %v346, %v333
          %v383 = vmul.f32 %v346, %v334
          %v384 = vmul.f32 %v346, %v335
          %v385 = vmul.f32 %v346, %v336
          %v386 = vmul.f32 %v346, %v337
          %v387 = vmul.f32 %v346, %v338
          %v388 = vmul.f32 %v346, %v339
          %v389 = vmul.f32 %v346, %v340
          %v390 = vmul.f32 %v346, %v341
          %v391 = vmul.f32 %v346, %v342
          %v392 = vmul.f32 %v346, %v343
          %v393 = vmul.f32 %v346, %v344
          %v394 = vmul.f32 %v346, %v345
          %395 = vst [vmem:[#allocation3] sm:$0xff] %v347
          %396 = vst [vmem:[#allocation3 + $0x8] sm:$0xff] %v348
          %397 = vst [vmem:[#allocation3 + $0x10] sm:$0xff] %v349
          %398 = vst [vmem:[#allocation3 + $0x18] sm:$0xff] %v350
          %399 = vst [vmem:[#allocation3 + $0x20] sm:$0xff] %v351
          %400 = vst [vmem:[#allocation3 + $0x28] sm:$0xff] %v352
          %401 = vst [vmem:[#allocation3 + $0x30] sm:$0xff] %v353
          %402 = vst [vmem:[#allocation3 + $0x38] sm:$0xff] %v354
          %403 = vst [vmem:[#allocation3 + $0x40] sm:$0xff] %v355
          %404 = vst [vmem:[#allocation3 + $0x48] sm:$0xff] %v356
          %405 = vst [vmem:[#allocation3 + $0x50] sm:$0xff] %v357
          %406 = vst [vmem:[#allocation3 + $0x58] sm:$0xff] %v358
          %407 = vst [vmem:[#allocation3 + $0x60] sm:$0xff] %v359
          %408 = vst [vmem:[#allocation3 + $0x68] sm:$0xff] %v360
          %409 = vst [vmem:[#allocation3 + $0x70] sm:$0xff] %v361
          %410 = vst [vmem:[#allocation3 + $0x78] sm:$0xff] %v362
          %411 = vst [vmem:[#allocation3 + $0x80] sm:$0xff] %v363
          %412 = vst [vmem:[#allocation3 + $0x88] sm:$0xff] %v364
          %413 = vst [vmem:[#allocation3 + $0x90] sm:$0xff] %v365
          %414 = vst [vmem:[#allocation3 + $0x98] sm:$0xff] %v366
          %415 = vst [vmem:[#allocation3 + $0xa0] sm:$0xff] %v367
          %416 = vst [vmem:[#allocation3 + $0xa8] sm:$0xff] %v368
          %417 = vst [vmem:[#allocation3 + $0xb0] sm:$0xff] %v369
          %418 = vst [vmem:[#allocation3 + $0xb8] sm:$0xff] %v370
          %419 = vst [vmem:[#allocation3 + $0xc0] sm:$0xff] %v371
          %420 = vst [vmem:[#allocation3 + $0xc8] sm:$0xff] %v372
          %421 = vst [vmem:[#allocation3 + $0xd0] sm:$0xff] %v373
          %422 = vst [vmem:[#allocation3 + $0xd8] sm:$0xff] %v374
          %423 = vst [vmem:[#allocation3 + $0xe0] sm:$0xff] %v375
          %424 = vst [vmem:[#allocation3 + $0xe8] sm:$0xff] %v376
          %425 = vst [vmem:[#allocation3 + $0xf0] sm:$0xff] %v377
          %426 = vst [vmem:[#allocation3 + $0xf8] sm:$0xff] %v378
          %427 = vst [vmem:[#allocation3 + $0x100] sm:$0xff] %v379
          %428 = vst [vmem:[#allocation3 + $0x108] sm:$0xff] %v380
          %429 = vst [vmem:[#allocation3 + $0x110] sm:$0xff] %v381
          %430 = vst [vmem:[#allocation3 + $0x118] sm:$0xff] %v382
          %431 = vst [vmem:[#allocation3 + $0x120] sm:$0xff] %v383
          %432 = vst [vmem:[#allocation3 + $0x128] sm:$0xff] %v384
          %433 = vst [vmem:[#allocation3 + $0x130] sm:$0xff] %v385
          %434 = vst [vmem:[#allocation3 + $0x138] sm:$0xff] %v386
          %435 = vst [vmem:[#allocation3 + $0x140] sm:$0xff] %v387
          %436 = vst [vmem:[#allocation3 + $0x148] sm:$0xff] %v388
          %437 = vst [vmem:[#allocation3 + $0x150] sm:$0xff] %v389
          %438 = vst [vmem:[#allocation3 + $0x158] sm:$0xff] %v390
          %439 = vst [vmem:[#allocation3 + $0x160] sm:$0xff] %v391
          %440 = vst [vmem:[#allocation3 + $0x168] sm:$0xff] %v392
          %441 = vst [vmem:[#allocation3 + $0x170] sm:$0xff] %v393
          %442 = vst [vmem:[#allocation3 + $0x178] sm:$0xff] %v394
        $region52: #{tpu_custom_call.1} parent=35 // pred_fallthru
          _
        %s443 = sadd.s32 %s25, 1
        %s444 = sand.u32 %s443, 1
        %s445 = smul.u32 %s444, 384
        %s446 = smul.u32 %s27, 384
        %s447 = sadd.s32 %s445, %s446
        %v448 = vld [vmem:[#allocation10] sm:$0xff]
        %v449 = vld [vmem:[#allocation10 + $0x8] sm:$0xf]
        %v450 = vld [vmem:[#allocation10 + $0xc] sm:$0xff]
        %v451 = vld [vmem:[#allocation10 + $0x14] sm:$0xf]
        %v452 = vld [vmem:[#allocation10 + $0x18] sm:$0xff]
        %v453 = vld [vmem:[#allocation10 + $0x20] sm:$0xf]
        %v454 = vld [vmem:[#allocation10 + $0x24] sm:$0xff]
        %v455 = vld [vmem:[#allocation10 + $0x2c] sm:$0xf]
        %v456 = vld [vmem:[#allocation10 + $0x30] sm:$0xff]
        %v457 = vld [vmem:[#allocation10 + $0x38] sm:$0xf]
        %v458 = vld [vmem:[#allocation10 + $0x3c] sm:$0xff]
        %v459 = vld [vmem:[#allocation10 + $0x44] sm:$0xf]
        %v460 = vld [vmem:[#allocation10 + $0x48] sm:$0xff]
        %v461 = vld [vmem:[#allocation10 + $0x50] sm:$0xf]
        %v462 = vld [vmem:[#allocation10 + $0x54] sm:$0xff]
        %v463 = vld [vmem:[#allocation10 + $0x5c] sm:$0xf]
        %v464 = vld [vmem:[#allocation10 + $0x60] sm:$0xff]
        %v465 = vld [vmem:[#allocation10 + $0x68] sm:$0xf]
        %v466 = vld [vmem:[#allocation10 + $0x6c] sm:$0xff]
        %v467 = vld [vmem:[#allocation10 + $0x74] sm:$0xf]
        %v468 = vld [vmem:[#allocation10 + $0x78] sm:$0xff]
        %v469 = vld [vmem:[#allocation10 + $0x80] sm:$0xf]
        %v470 = vld [vmem:[#allocation10 + $0x84] sm:$0xff]
        %v471 = vld [vmem:[#allocation10 + $0x8c] sm:$0xf]
        %v472 = vld [vmem:[#allocation10 + $0x90] sm:$0xff]
        %v473 = vld [vmem:[#allocation10 + $0x98] sm:$0xf]
        %v474 = vld [vmem:[#allocation10 + $0x9c] sm:$0xff]
        %v475 = vld [vmem:[#allocation10 + $0xa4] sm:$0xf]
        %v476 = vld [vmem:[#allocation10 + $0xa8] sm:$0xff]
        %v477 = vld [vmem:[#allocation10 + $0xb0] sm:$0xf]
        %v478 = vld [vmem:[#allocation10 + $0xb4] sm:$0xff]
        %v479 = vld [vmem:[#allocation10 + $0xbc] sm:$0xf]
        %v480 = vld [vmem:[#allocation10 + $0xc0] sm:$0xff]
        %v481 = vld [vmem:[#allocation10 + $0xc8] sm:$0xf]
        %v482 = vld [vmem:[#allocation10 + $0xcc] sm:$0xff]
        %v483 = vld [vmem:[#allocation10 + $0xd4] sm:$0xf]
        %v484 = vld [vmem:[#allocation10 + $0xd8] sm:$0xff]
        %v485 = vld [vmem:[#allocation10 + $0xe0] sm:$0xf]
        %v486 = vld [vmem:[#allocation10 + $0xe4] sm:$0xff]
        %v487 = vld [vmem:[#allocation10 + $0xec] sm:$0xf]
        %v488 = vld [vmem:[#allocation10 + $0xf0] sm:$0xff]
        %v489 = vld [vmem:[#allocation10 + $0xf8] sm:$0xf]
        %v490 = vld [vmem:[#allocation10 + $0xfc] sm:$0xff]
        %v491 = vld [vmem:[#allocation10 + $0x104] sm:$0xf]
        %v492 = vld [vmem:[#allocation10 + $0x108] sm:$0xff]
        %v493 = vld [vmem:[#allocation10 + $0x110] sm:$0xf]
        %v494 = vld [vmem:[#allocation10 + $0x114] sm:$0xff]
        %v495 = vld [vmem:[#allocation10 + $0x11c] sm:$0xf]
        %v496 = vld [vmem:[#allocation10 + $0x120] sm:$0xff]
        %v497 = vld [vmem:[#allocation10 + $0x128] sm:$0xf]
        %v498 = vld [vmem:[#allocation10 + $0x12c] sm:$0xff]
        %v499 = vld [vmem:[#allocation10 + $0x134] sm:$0xf]
        %v500 = vld [vmem:[#allocation10 + $0x138] sm:$0xff]
        %v501 = vld [vmem:[#allocation10 + $0x140] sm:$0xf]
        %v502 = vld [vmem:[#allocation10 + $0x144] sm:$0xff]
        %v503 = vld [vmem:[#allocation10 + $0x14c] sm:$0xf]
        %v504 = vld [vmem:[#allocation10 + $0x150] sm:$0xff]
        %v505 = vld [vmem:[#allocation10 + $0x158] sm:$0xf]
        %v506 = vld [vmem:[#allocation10 + $0x15c] sm:$0xff]
        %v507 = vld [vmem:[#allocation10 + $0x164] sm:$0xf]
        %v508 = vld [vmem:[#allocation10 + $0x168] sm:$0xff]
        %v509 = vld [vmem:[#allocation10 + $0x170] sm:$0xf]
        %v510 = vld [vmem:[#allocation10 + $0x174] sm:$0xff]
        %v511 = vld [vmem:[#allocation10 + $0x17c] sm:$0xf]
        %v512 = vld [vmem:[#allocation10 + $0x180] sm:$0xff]
        %v513 = vld [vmem:[#allocation10 + $0x188] sm:$0xf]
        %v514 = vld [vmem:[#allocation10 + $0x18c] sm:$0xff]
        %v515 = vld [vmem:[#allocation10 + $0x194] sm:$0xf]
        %v516 = vld [vmem:[#allocation10 + $0x198] sm:$0xff]
        %v517 = vld [vmem:[#allocation10 + $0x1a0] sm:$0xf]
        %v518 = vld [vmem:[#allocation10 + $0x1a4] sm:$0xff]
        %v519 = vld [vmem:[#allocation10 + $0x1ac] sm:$0xf]
        %v520 = vld [vmem:[#allocation10 + $0x1b0] sm:$0xff]
        %v521 = vld [vmem:[#allocation10 + $0x1b8] sm:$0xf]
        %v522 = vld [vmem:[#allocation10 + $0x1bc] sm:$0xff]
        %v523 = vld [vmem:[#allocation10 + $0x1c4] sm:$0xf]
        %v524 = vld [vmem:[#allocation10 + $0x1c8] sm:$0xff]
        %v525 = vld [vmem:[#allocation10 + $0x1d0] sm:$0xf]
        %v526 = vld [vmem:[#allocation10 + $0x1d4] sm:$0xff]
        %v527 = vld [vmem:[#allocation10 + $0x1dc] sm:$0xf]
        %v528 = vld [vmem:[#allocation10 + $0x1e0] sm:$0xff]
        %v529 = vld [vmem:[#allocation10 + $0x1e8] sm:$0xf]
        %v530 = vld [vmem:[#allocation10 + $0x1ec] sm:$0xff]
        %v531 = vld [vmem:[#allocation10 + $0x1f4] sm:$0xf]
        %v532 = vld [vmem:[#allocation10 + $0x1f8] sm:$0xff]
        %v533 = vld [vmem:[#allocation10 + $0x200] sm:$0xf]
        %v534 = vld [vmem:[#allocation10 + $0x204] sm:$0xff]
        %v535 = vld [vmem:[#allocation10 + $0x20c] sm:$0xf]
        %v536 = vld [vmem:[#allocation10 + $0x210] sm:$0xff]
        %v537 = vld [vmem:[#allocation10 + $0x218] sm:$0xf]
        %v538 = vld [vmem:[#allocation10 + $0x21c] sm:$0xff]
        %v539 = vld [vmem:[#allocation10 + $0x224] sm:$0xf]
        %v540 = vld [vmem:[#allocation10 + $0x228] sm:$0xff]
        %v541 = vld [vmem:[#allocation10 + $0x230] sm:$0xf]
        %v542 = vld [vmem:[#allocation10 + $0x234] sm:$0xff]
        %v543 = vld [vmem:[#allocation10 + $0x23c] sm:$0xf]
        %s544 = sshra.s32 %s447, 4
        %s545 = sand.u32 %s447, 15
        %s546 = smul.addr %s544, 8
        %s547 = scalar_lea.vmem [#allocation2], %s546
        %v548 = vld [vmem:[%s547] sm:$0xff]
        %v549 = vld [vmem:[%s547 + $0x8] sm:$0xff]
        %v550 = vld [vmem:[%s547 + $0x10] sm:$0xff]
        %v551 = vld [vmem:[%s547 + $0x18] sm:$0xff]
        %v552 = vld [vmem:[%s547 + $0x20] sm:$0xff]
        %v553 = vld [vmem:[%s547 + $0x28] sm:$0xff]
        %v554 = vld [vmem:[%s547 + $0x30] sm:$0xff]
        %v555 = vld [vmem:[%s547 + $0x38] sm:$0xff]
        %v556 = vld [vmem:[%s547 + $0x40] sm:$0xff]
        %v557 = vld [vmem:[%s547 + $0x48] sm:$0xff]
        %v558 = vld [vmem:[%s547 + $0x50] sm:$0xff]
        %v559 = vld [vmem:[%s547 + $0x58] sm:$0xff]
        %v560 = vld [vmem:[%s547 + $0x60] sm:$0xff]
        %v561 = vld [vmem:[%s547 + $0x68] sm:$0xff]
        %v562 = vld [vmem:[%s547 + $0x70] sm:$0xff]
        %v563 = vld [vmem:[%s547 + $0x78] sm:$0xff]
        %v564 = vld [vmem:[%s547 + $0x80] sm:$0xff]
        %v565 = vld [vmem:[%s547 + $0x88] sm:$0xff]
        %v566 = vld [vmem:[%s547 + $0x90] sm:$0xff]
        %v567 = vld [vmem:[%s547 + $0x98] sm:$0xff]
        %v568 = vld [vmem:[%s547 + $0xa0] sm:$0xff]
        %v569 = vld [vmem:[%s547 + $0xa8] sm:$0xff]
        %v570 = vld [vmem:[%s547 + $0xb0] sm:$0xff]
        %v571 = vld [vmem:[%s547 + $0xb8] sm:$0xff]
        %v668 = vunpack.c.l.b16 %v448
        %v669 = vunpack.c.h.b16 %v448
        %v670 = vunpack.c.l.b16 %v449
        %v671 = vunpack.c.l.b16 %v450
        %v672 = vunpack.c.h.b16 %v450
        %v673 = vunpack.c.l.b16 %v451
        %v674 = vunpack.c.l.b16 %v452
        %v675 = vunpack.c.h.b16 %v452
        %v676 = vunpack.c.l.b16 %v453
        %v677 = vunpack.c.l.b16 %v454
        %v678 = vunpack.c.h.b16 %v454
        %v679 = vunpack.c.l.b16 %v455
        %v680 = vunpack.c.l.b16 %v456
        %v681 = vunpack.c.h.b16 %v456
        %v682 = vunpack.c.l.b16 %v457
        %v683 = vunpack.c.l.b16 %v458
        %v684 = vunpack.c.h.b16 %v458
        %v685 = vunpack.c.l.b16 %v459
        %v686 = vunpack.c.l.b16 %v460
        %v687 = vunpack.c.h.b16 %v460
        %v688 = vunpack.c.l.b16 %v461
        %v689 = vunpack.c.l.b16 %v462
        %v690 = vunpack.c.h.b16 %v462
        %v691 = vunpack.c.l.b16 %v463
        %v692 = vunpack.c.l.b16 %v464
        %v693 = vunpack.c.h.b16 %v464
        %v694 = vunpack.c.l.b16 %v465
        %v695 = vunpack.c.l.b16 %v466
        %v696 = vunpack.c.h.b16 %v466
        %v697 = vunpack.c.l.b16 %v467
        %v698 = vunpack.c.l.b16 %v468
        %v699 = vunpack.c.h.b16 %v468
        %v700 = vunpack.c.l.b16 %v469
        %v701 = vunpack.c.l.b16 %v470
        %v702 = vunpack.c.h.b16 %v470
        %v703 = vunpack.c.l.b16 %v471
        %v704 = vunpack.c.l.b16 %v472
        %v705 = vunpack.c.h.b16 %v472
        %v706 = vunpack.c.l.b16 %v473
        %v707 = vunpack.c.l.b16 %v474
        %v708 = vunpack.c.h.b16 %v474
        %v709 = vunpack.c.l.b16 %v475
        %v710 = vunpack.c.l.b16 %v476
        %v711 = vunpack.c.h.b16 %v476
        %v712 = vunpack.c.l.b16 %v477
        %v713 = vunpack.c.l.b16 %v478
        %v714 = vunpack.c.h.b16 %v478
        %v715 = vunpack.c.l.b16 %v479
        %v716 = vunpack.c.l.b16 %v480
        %v717 = vunpack.c.h.b16 %v480
        %v718 = vunpack.c.l.b16 %v481
        %v719 = vunpack.c.l.b16 %v482
        %v720 = vunpack.c.h.b16 %v482
        %v721 = vunpack.c.l.b16 %v483
        %v722 = vunpack.c.l.b16 %v484
        %v723 = vunpack.c.h.b16 %v484
        %v724 = vunpack.c.l.b16 %v485
        %v725 = vunpack.c.l.b16 %v486
        %v726 = vunpack.c.h.b16 %v486
        %v727 = vunpack.c.l.b16 %v487
        %v728 = vunpack.c.l.b16 %v488
        %v729 = vunpack.c.h.b16 %v488
        %v730 = vunpack.c.l.b16 %v489
        %v731 = vunpack.c.l.b16 %v490
        %v732 = vunpack.c.h.b16 %v490
        %v733 = vunpack.c.l.b16 %v491
        %v734 = vunpack.c.l.b16 %v492
        %v735 = vunpack.c.h.b16 %v492
        %v736 = vunpack.c.l.b16 %v493
        %v737 = vunpack.c.l.b16 %v494
        %v738 = vunpack.c.h.b16 %v494
        %v739 = vunpack.c.l.b16 %v495
        %v740 = vunpack.c.l.b16 %v496
        %v741 = vunpack.c.h.b16 %v496
        %v742 = vunpack.c.l.b16 %v497
        %v743 = vunpack.c.l.b16 %v498
        %v744 = vunpack.c.h.b16 %v498
        %v745 = vunpack.c.l.b16 %v499
        %v746 = vunpack.c.l.b16 %v500
        %v747 = vunpack.c.h.b16 %v500
        %v748 = vunpack.c.l.b16 %v501
        %v749 = vunpack.c.l.b16 %v502
        %v750 = vunpack.c.h.b16 %v502
        %v751 = vunpack.c.l.b16 %v503
        %v752 = vunpack.c.l.b16 %v504
        %v753 = vunpack.c.h.b16 %v504
        %v754 = vunpack.c.l.b16 %v505
        %v755 = vunpack.c.l.b16 %v506
        %v756 = vunpack.c.h.b16 %v506
        %v757 = vunpack.c.l.b16 %v507
        %v758 = vunpack.c.l.b16 %v508
        %v759 = vunpack.c.h.b16 %v508
        %v760 = vunpack.c.l.b16 %v509
        %v761 = vunpack.c.l.b16 %v510
        %v762 = vunpack.c.h.b16 %v510
        %v763 = vunpack.c.l.b16 %v511
        %v764 = vunpack.c.l.b16 %v512
        %v765 = vunpack.c.h.b16 %v512
        %v766 = vunpack.c.l.b16 %v513
        %v767 = vunpack.c.l.b16 %v514
        %v768 = vunpack.c.h.b16 %v514
        %v769 = vunpack.c.l.b16 %v515
        %v770 = vunpack.c.l.b16 %v516
        %v771 = vunpack.c.h.b16 %v516
        %v772 = vunpack.c.l.b16 %v517
        %v773 = vunpack.c.l.b16 %v518
        %v774 = vunpack.c.h.b16 %v518
        %v775 = vunpack.c.l.b16 %v519
        %v776 = vunpack.c.l.b16 %v520
        %v777 = vunpack.c.h.b16 %v520
        %v778 = vunpack.c.l.b16 %v521
        %v779 = vunpack.c.l.b16 %v522
        %v780 = vunpack.c.h.b16 %v522
        %v781 = vunpack.c.l.b16 %v523
        %v782 = vunpack.c.l.b16 %v524
        %v783 = vunpack.c.h.b16 %v524
        %v784 = vunpack.c.l.b16 %v525
        %v785 = vunpack.c.l.b16 %v526
        %v786 = vunpack.c.h.b16 %v526
        %v787 = vunpack.c.l.b16 %v527
        %v788 = vunpack.c.l.b16 %v528
        %v789 = vunpack.c.h.b16 %v528
        %v790 = vunpack.c.l.b16 %v529
        %v791 = vunpack.c.l.b16 %v530
        %v792 = vunpack.c.h.b16 %v530
        %v793 = vunpack.c.l.b16 %v531
        %v794 = vunpack.c.l.b16 %v532
        %v795 = vunpack.c.h.b16 %v532
        %v796 = vunpack.c.l.b16 %v533
        %v797 = vunpack.c.l.b16 %v534
        %v798 = vunpack.c.h.b16 %v534
        %v799 = vunpack.c.l.b16 %v535
        %v800 = vunpack.c.l.b16 %v536
        %v801 = vunpack.c.h.b16 %v536
        %v802 = vunpack.c.l.b16 %v537
        %v803 = vunpack.c.l.b16 %v538
        %v804 = vunpack.c.h.b16 %v538
        %v805 = vunpack.c.l.b16 %v539
        %v806 = vunpack.c.l.b16 %v540
        %v807 = vunpack.c.h.b16 %v540
        %v808 = vunpack.c.l.b16 %v541
        %v809 = vunpack.c.l.b16 %v542
        %v810 = vunpack.c.h.b16 %v542
        %v811 = vunpack.c.l.b16 %v543
        %v812 = vpack.c.b16 %v671, %v668
        %v813 = vpack.c.b16 %v672, %v669
        %v814 = vpack.c.b16 %v673, %v670
        %v815 = vpack.c.b16 %v677, %v674
        %v816 = vpack.c.b16 %v678, %v675
        %v817 = vpack.c.b16 %v679, %v676
        %v818 = vpack.c.b16 %v683, %v680
        %v819 = vpack.c.b16 %v684, %v681
        %v820 = vpack.c.b16 %v685, %v682
        %v821 = vpack.c.b16 %v689, %v686
        %v822 = vpack.c.b16 %v690, %v687
        %v823 = vpack.c.b16 %v691, %v688
        %v824 = vpack.c.b16 %v695, %v692
        %v825 = vpack.c.b16 %v696, %v693
        %v826 = vpack.c.b16 %v697, %v694
        %v827 = vpack.c.b16 %v701, %v698
        %v828 = vpack.c.b16 %v702, %v699
        %v829 = vpack.c.b16 %v703, %v700
        %v830 = vpack.c.b16 %v707, %v704
        %v831 = vpack.c.b16 %v708, %v705
        %v832 = vpack.c.b16 %v709, %v706
        %v833 = vpack.c.b16 %v713, %v710
        %v834 = vpack.c.b16 %v714, %v711
        %v835 = vpack.c.b16 %v715, %v712
        %v836 = vpack.c.b16 %v719, %v716
        %v837 = vpack.c.b16 %v720, %v717
        %v838 = vpack.c.b16 %v721, %v718
        %v839 = vpack.c.b16 %v725, %v722
        %v840 = vpack.c.b16 %v726, %v723
        %v841 = vpack.c.b16 %v727, %v724
        %v842 = vpack.c.b16 %v731, %v728
        %v843 = vpack.c.b16 %v732, %v729
        %v844 = vpack.c.b16 %v733, %v730
        %v845 = vpack.c.b16 %v737, %v734
        %v846 = vpack.c.b16 %v738, %v735
        %v847 = vpack.c.b16 %v739, %v736
        %v848 = vpack.c.b16 %v743, %v740
        %v849 = vpack.c.b16 %v744, %v741
        %v850 = vpack.c.b16 %v745, %v742
        %v851 = vpack.c.b16 %v749, %v746
        %v852 = vpack.c.b16 %v750, %v747
        %v853 = vpack.c.b16 %v751, %v748
        %v854 = vpack.c.b16 %v755, %v752
        %v855 = vpack.c.b16 %v756, %v753
        %v856 = vpack.c.b16 %v757, %v754
        %v857 = vpack.c.b16 %v761, %v758
        %v858 = vpack.c.b16 %v762, %v759
        %v859 = vpack.c.b16 %v763, %v760
        %v860 = vpack.c.b16 %v767, %v764
        %v861 = vpack.c.b16 %v768, %v765
        %v862 = vpack.c.b16 %v769, %v766
        %v863 = vpack.c.b16 %v773, %v770
        %v864 = vpack.c.b16 %v774, %v771
        %v865 = vpack.c.b16 %v775, %v772
        %v866 = vpack.c.b16 %v779, %v776
        %v867 = vpack.c.b16 %v780, %v777
        %v868 = vpack.c.b16 %v781, %v778
        %v869 = vpack.c.b16 %v785, %v782
        %v870 = vpack.c.b16 %v786, %v783
        %v871 = vpack.c.b16 %v787, %v784
        %v872 = vpack.c.b16 %v791, %v788
        %v873 = vpack.c.b16 %v792, %v789
        %v874 = vpack.c.b16 %v793, %v790
        %v875 = vpack.c.b16 %v797, %v794
        %v876 = vpack.c.b16 %v798, %v795
        %v877 = vpack.c.b16 %v799, %v796
        %v878 = vpack.c.b16 %v803, %v800
        %v879 = vpack.c.b16 %v804, %v801
        %v880 = vpack.c.b16 %v805, %v802
        %v881 = vpack.c.b16 %v809, %v806
        %v882 = vpack.c.b16 %v810, %v807
        %v883 = vpack.c.b16 %v811, %v808
        %956 = vmatprep.subr.bf16.mxu0 0
        %957 = vmatpush1.bf16.msra.mxu0 %v548
        %958 = vmatprep.subr.bf16.mxu0 0
        %959 = vmatpush1.bf16.msra.mxu0 %v549
        %960 = vmatprep.subr.bf16.mxu0 0
        %961 = vmatpush1.bf16.msra.mxu0 %v550
        %962 = vmatprep.subr.bf16.mxu0 0
        %963 = vmatpush1.bf16.msra.mxu0 %v551
        %964 = vmatprep.subr.bf16.mxu0 0
        %965 = vmatpush1.bf16.msra.mxu0 %v552
        %966 = vmatprep.subr.bf16.mxu0 0
        %967 = vmatpush1.bf16.msra.mxu0 %v553
        %968 = vmatprep.subr.bf16.mxu0 0
        %969 = vmatpush1.bf16.msra.mxu0 %v554
        %970 = vmatprep.subr.bf16.mxu0 0
        %971 = vmatpush1.bf16.msra.mxu0 %v555
        %972 = vmatprep.subr.bf16.mxu0 0
        %973 = vmatpush1.bf16.msra.mxu0 %v556
        %974 = vmatprep.subr.bf16.mxu0 0
        %975 = vmatpush1.bf16.msra.mxu0 %v557
        %976 = vmatprep.subr.bf16.mxu0 0
        %977 = vmatpush1.bf16.msra.mxu0 %v558
        %978 = vmatprep.subr.bf16.mxu0 0
        %979 = vmatpush1.bf16.msra.mxu0 %v559
        %980 = vmatprep.subr.bf16.mxu0 0
        %981 = vmatpush1.bf16.msra.mxu0 %v560
        %982 = vmatprep.subr.bf16.mxu0 0
        %983 = vmatpush1.bf16.msra.mxu0 %v561
        %984 = vmatprep.subr.bf16.mxu0 0
        %985 = vmatpush1.bf16.msra.mxu0 %v562
        %986 = vmatprep.subr.bf16.mxu0 0
        %987 = vmatpush1.bf16.msra.mxu0 %v563
        %988 = vmatprep.mubr.bf16.mxu0 %v813
        %989 = vmatmul.mubr.bf16.gmra.mrb[0].mxu0 %v812
        %v990 = vpop.f32.mrb[0].mxu0
        %v991 = vadd.f32 0.0, %v990
        %v992 = vpop.f32.mrb[0].mxu0
        %v993 = vpop.f32.mrb[0].mxu0
        %v994 = vadd.f32 0.0, %v993
        %v995 = vpop.f32.mrb[0].mxu0
        %996 = vmatprep.mubr.bf16.mxu0 %v816
        %997 = vmatmul.mubr.bf16.gmra.mrb[0].mxu0 %v815
        %v998 = vpop.f32.mrb[0].mxu0
        %v999 = vadd.f32 0.0, %v998
        %v1000 = vpop.f32.mrb[0].mxu0
        %v1001 = vpop.f32.mrb[0].mxu0
        %v1002 = vadd.f32 0.0, %v1001
        %v1003 = vpop.f32.mrb[0].mxu0
        %1004 = vmatprep.mubr.bf16.mxu0 %v819
        %1005 = vmatmul.mubr.bf16.gmra.mrb[0].mxu0 %v818
        %v1006 = vpop.f32.mrb[0].mxu0
        %v1007 = vadd.f32 0.0, %v1006
        %v1008 = vpop.f32.mrb[0].mxu0
        %v1009 = vpop.f32.mrb[0].mxu0
        %v1010 = vadd.f32 0.0, %v1009
        %v1011 = vpop.f32.mrb[0].mxu0
        %1012 = vmatprep.mubr.bf16.mxu0 %v822
        %1013 = vmatmul.mubr.bf16.gmra.mrb[0].mxu0 %v821
        %v1014 = vpop.f32.mrb[0].mxu0
        %v1015 = vadd.f32 0.0, %v1014
        %v1016 = vpop.f32.mrb[0].mxu0
        %v1017 = vpop.f32.mrb[0].mxu0
        %v1018 = vadd.f32 0.0, %v1017
        %v1019 = vpop.f32.mrb[0].mxu0
        %1020 = vmatprep.mubr.bf16.mxu0 %v825
        %1021 = vmatmul.mubr.bf16.gmra.mrb[0].mxu0 %v824
        %v1022 = vpop.f32.mrb[0].mxu0
        %v1023 = vadd.f32 0.0, %v1022
        %v1024 = vpop.f32.mrb[0].mxu0
        %v1025 = vpop.f32.mrb[0].mxu0
        %v1026 = vadd.f32 0.0, %v1025
        %v1027 = vpop.f32.mrb[0].mxu0
        %1028 = vmatprep.mubr.bf16.mxu0 %v828
        %1029 = vmatmul.mubr.bf16.gmra.mrb[0].mxu0 %v827
        %v1030 = vpop.f32.mrb[0].mxu0
        %v1031 = vadd.f32 0.0, %v1030
        %v1032 = vpop.f32.mrb[0].mxu0
        %v1033 = vpop.f32.mrb[0].mxu0
        %v1034 = vadd.f32 0.0, %v1033
        %v1035 = vpop.f32.mrb[0].mxu0
        %1036 = vmatprep.mubr.bf16.mxu0 %v831
        %1037 = vmatmul.mubr.bf16.gmra.mrb[0].mxu0 %v830
        %v1038 = vpop.f32.mrb[0].mxu0
        %v1039 = vadd.f32 0.0, %v1038
        %v1040 = vpop.f32.mrb[0].mxu0
        %v1041 = vpop.f32.mrb[0].mxu0
        %v1042 = vadd.f32 0.0, %v1041
        %v1043 = vpop.f32.mrb[0].mxu0
        %1044 = vmatprep.mubr.bf16.mxu0 %v834
        %1045 = vmatmul.mubr.bf16.gmra.mrb[0].mxu0 %v833
        %v1046 = vpop.f32.mrb[0].mxu0
        %v1047 = vadd.f32 0.0, %v1046
        %v1048 = vpop.f32.mrb[0].mxu0
        %v1049 = vpop.f32.mrb[0].mxu0
        %v1050 = vadd.f32 0.0, %v1049
        %v1051 = vpop.f32.mrb[0].mxu0
        %1052 = vmatprep.mubr.bf16.mxu0 %v837
        %1053 = vmatmul.mubr.bf16.gmra.mrb[0].mxu0 %v836
        %v1054 = vpop.f32.mrb[0].mxu0
        %v1055 = vadd.f32 0.0, %v1054
        %v1056 = vpop.f32.mrb[0].mxu0
        %v1057 = vpop.f32.mrb[0].mxu0
        %v1058 = vadd.f32 0.0, %v1057
        %v1059 = vpop.f32.mrb[0].mxu0
        %1060 = vmatprep.mubr.bf16.mxu0 %v840
        %1061 = vmatmul.mubr.bf16.gmra.mrb[0].mxu0 %v839
        %v1062 = vpop.f32.mrb[0].mxu0
        %v1063 = vadd.f32 0.0, %v1062
        %v1064 = vpop.f32.mrb[0].mxu0
        %v1065 = vpop.f32.mrb[0].mxu0
        %v1066 = vadd.f32 0.0, %v1065
        %v1067 = vpop.f32.mrb[0].mxu0
        %1068 = vmatprep.mubr.bf16.mxu0 %v843
        %1069 = vmatmul.mubr.bf16.gmra.mrb[0].mxu0 %v842
        %v1070 = vpop.f32.mrb[0].mxu0
        %v1071 = vadd.f32 0.0, %v1070
        %v1072 = vpop.f32.mrb[0].mxu0
        %v1073 = vpop.f32.mrb[0].mxu0
        %v1074 = vadd.f32 0.0, %v1073
        %v1075 = vpop.f32.mrb[0].mxu0
        %1076 = vmatprep.mubr.bf16.mxu0 %v846
        %1077 = vmatmul.mubr.bf16.gmra.mrb[0].mxu0 %v845
        %v1078 = vpop.f32.mrb[0].mxu0
        %v1079 = vadd.f32 0.0, %v1078
        %v1080 = vpop.f32.mrb[0].mxu0
        %v1081 = vpop.f32.mrb[0].mxu0
        %v1082 = vadd.f32 0.0, %v1081
        %v1083 = vpop.f32.mrb[0].mxu0
        %1084 = vmatprep.mubr.bf16.mxu0 %v849
        %1085 = vmatmul.mubr.bf16.gmra.mrb[0].mxu0 %v848
        %v1086 = vpop.f32.mrb[0].mxu0
        %v1087 = vadd.f32 0.0, %v1086
        %v1088 = vpop.f32.mrb[0].mxu0
        %v1089 = vpop.f32.mrb[0].mxu0
        %v1090 = vadd.f32 0.0, %v1089
        %v1091 = vpop.f32.mrb[0].mxu0
        %1092 = vmatprep.mubr.bf16.mxu0 %v852
        %1093 = vmatmul.mubr.bf16.gmra.mrb[0].mxu0 %v851
        %v1094 = vpop.f32.mrb[0].mxu0
        %v1095 = vadd.f32 0.0, %v1094
        %v1096 = vpop.f32.mrb[0].mxu0
        %v1097 = vpop.f32.mrb[0].mxu0
        %v1098 = vadd.f32 0.0, %v1097
        %v1099 = vpop.f32.mrb[0].mxu0
        %1100 = vmatprep.mubr.bf16.mxu0 %v855
        %1101 = vmatmul.mubr.bf16.gmra.mrb[0].mxu0 %v854
        %v1102 = vpop.f32.mrb[0].mxu0
        %v1103 = vadd.f32 0.0, %v1102
        %v1104 = vpop.f32.mrb[0].mxu0
        %v1105 = vpop.f32.mrb[0].mxu0
        %v1106 = vadd.f32 0.0, %v1105
        %v1107 = vpop.f32.mrb[0].mxu0
        %1108 = vmatprep.mubr.bf16.mxu0 %v858
        %1109 = vmatmul.mubr.bf16.gmra.mrb[0].mxu0 %v857
        %v1110 = vpop.f32.mrb[0].mxu0
        %v1111 = vadd.f32 0.0, %v1110
        %v1112 = vpop.f32.mrb[0].mxu0
        %v1113 = vpop.f32.mrb[0].mxu0
        %v1114 = vadd.f32 0.0, %v1113
        %v1115 = vpop.f32.mrb[0].mxu0
        %1116 = vmatprep.mubr.bf16.mxu0 %v861
        %1117 = vmatmul.mubr.bf16.gmra.mrb[0].mxu0 %v860
        %v1118 = vpop.f32.mrb[0].mxu0
        %v1119 = vadd.f32 0.0, %v1118
        %v1120 = vpop.f32.mrb[0].mxu0
        %v1121 = vpop.f32.mrb[0].mxu0
        %v1122 = vadd.f32 0.0, %v1121
        %v1123 = vpop.f32.mrb[0].mxu0
        %1124 = vmatprep.mubr.bf16.mxu0 %v864
        %1125 = vmatmul.mubr.bf16.gmra.mrb[0].mxu0 %v863
        %v1126 = vpop.f32.mrb[0].mxu0
        %v1127 = vadd.f32 0.0, %v1126
        %v1128 = vpop.f32.mrb[0].mxu0
        %v1129 = vpop.f32.mrb[0].mxu0
        %v1130 = vadd.f32 0.0, %v1129
        %v1131 = vpop.f32.mrb[0].mxu0
        %1132 = vmatprep.mubr.bf16.mxu0 %v867
        %1133 = vmatmul.mubr.bf16.gmra.mrb[0].mxu0 %v866
        %v1134 = vpop.f32.mrb[0].mxu0
        %v1135 = vadd.f32 0.0, %v1134
        %v1136 = vpop.f32.mrb[0].mxu0
        %v1137 = vpop.f32.mrb[0].mxu0
        %v1138 = vadd.f32 0.0, %v1137
        %v1139 = vpop.f32.mrb[0].mxu0
        %1140 = vmatprep.mubr.bf16.mxu0 %v870
        %1141 = vmatmul.mubr.bf16.gmra.mrb[0].mxu0 %v869
        %v1142 = vpop.f32.mrb[0].mxu0
        %v1143 = vadd.f32 0.0, %v1142
        %v1144 = vpop.f32.mrb[0].mxu0
        %v1145 = vpop.f32.mrb[0].mxu0
        %v1146 = vadd.f32 0.0, %v1145
        %v1147 = vpop.f32.mrb[0].mxu0
        %1148 = vmatprep.mubr.bf16.mxu0 %v873
        %1149 = vmatmul.mubr.bf16.gmra.mrb[0].mxu0 %v872
        %v1150 = vpop.f32.mrb[0].mxu0
        %v1151 = vadd.f32 0.0, %v1150
        %v1152 = vpop.f32.mrb[0].mxu0
        %v1153 = vpop.f32.mrb[0].mxu0
        %v1154 = vadd.f32 0.0, %v1153
        %v1155 = vpop.f32.mrb[0].mxu0
        %1156 = vmatprep.mubr.bf16.mxu0 %v876
        %1157 = vmatmul.mubr.bf16.gmra.mrb[0].mxu0 %v875
        %v1158 = vpop.f32.mrb[0].mxu0
        %v1159 = vadd.f32 0.0, %v1158
        %v1160 = vpop.f32.mrb[0].mxu0
        %v1161 = vpop.f32.mrb[0].mxu0
        %v1162 = vadd.f32 0.0, %v1161
        %v1163 = vpop.f32.mrb[0].mxu0
        %1164 = vmatprep.mubr.bf16.mxu0 %v879
        %1165 = vmatmul.mubr.bf16.gmra.mrb[0].mxu0 %v878
        %v1166 = vpop.f32.mrb[0].mxu0
        %v1167 = vadd.f32 0.0, %v1166
        %v1168 = vpop.f32.mrb[0].mxu0
        %v1169 = vpop.f32.mrb[0].mxu0
        %v1170 = vadd.f32 0.0, %v1169
        %v1171 = vpop.f32.mrb[0].mxu0
        %1172 = vmatprep.mubr.bf16.mxu0 %v882
        %1173 = vmatmul.mubr.bf16.gmra.mrb[0].mxu0 %v881
        %v1174 = vpop.f32.mrb[0].mxu0
        %v1175 = vadd.f32 0.0, %v1174
        %v1176 = vpop.f32.mrb[0].mxu0
        %v1177 = vpop.f32.mrb[0].mxu0
        %v1178 = vadd.f32 0.0, %v1177
        %v1179 = vpop.f32.mrb[0].mxu0
        %1180 = vdwg.mxu0
        %1181 = vmatprep.subr.bf16.mxu0 0
        %1182 = vmatpush1.bf16.msra.mxu0 %v564
        %1183 = vmatprep.subr.bf16.mxu0 0
        %1184 = vmatpush1.bf16.msra.mxu0 %v565
        %1185 = vmatprep.subr.bf16.mxu0 0
        %1186 = vmatpush1.bf16.msra.mxu0 %v566
        %1187 = vmatprep.subr.bf16.mxu0 0
        %1188 = vmatpush1.bf16.msra.mxu0 %v567
        %1189 = vmatprep.subr.bf16.mxu0 0
        %1190 = vmatpush1.bf16.msra.mxu0 %v568
        %1191 = vmatprep.subr.bf16.mxu0 0
        %1192 = vmatpush1.bf16.msra.mxu0 %v569
        %1193 = vmatprep.subr.bf16.mxu0 0
        %1194 = vmatpush1.bf16.msra.mxu0 %v570
        %1195 = vmatprep.subr.bf16.mxu0 0
        %1196 = vmatpush1.bf16.msra.mxu0 %v571
        %1197 = vmatprep.subr.bf16.mxu0 0
        %1198 = vmatpush1.bf16.msra.mxu0 0
        %1199 = vmatprep.subr.bf16.mxu0 0
        %1200 = vmatpush1.bf16.msra.mxu0 0
        %1201 = vmatprep.subr.bf16.mxu0 0
        %1202 = vmatpush1.bf16.msra.mxu0 0
        %1203 = vmatprep.subr.bf16.mxu0 0
        %1204 = vmatpush1.bf16.msra.mxu0 0
        %1205 = vmatprep.subr.bf16.mxu0 0
        %1206 = vmatpush1.bf16.msra.mxu0 0
        %1207 = vmatprep.subr.bf16.mxu0 0
        %1208 = vmatpush1.bf16.msra.mxu0 0
        %1209 = vmatprep.subr.bf16.mxu0 0
        %1210 = vmatpush1.bf16.msra.mxu0 0
        %1211 = vmatprep.subr.bf16.mxu0 0
        %1212 = vmatpush1.bf16.msra.mxu0 0
        %1213 = vmatprep.mubr.bf16.mxu0 0
        %1214 = vmatmul.mubr.bf16.gmra.mrb[0].mxu0 %v814
        %v1215 = vpop.f32.mrb[0].mxu0
        %v1216 = vadd.f32 %v991, %v1215
        %v1217 = vpop.f32.mrb[0].mxu0
        %v1218 = vpop.f32.mrb[0].mxu0
        %v1219 = vadd.f32 %v994, %v1218
        %v1220 = vpop.f32.mrb[0].mxu0
        %1221 = vmatprep.mubr.bf16.mxu0 0
        %1222 = vmatmul.mubr.bf16.gmra.mrb[0].mxu0 %v817
        %v1223 = vpop.f32.mrb[0].mxu0
        %v1224 = vadd.f32 %v999, %v1223
        %v1225 = vpop.f32.mrb[0].mxu0
        %v1226 = vpop.f32.mrb[0].mxu0
        %v1227 = vadd.f32 %v1002, %v1226
        %v1228 = vpop.f32.mrb[0].mxu0
        %1229 = vmatprep.mubr.bf16.mxu0 0
        %1230 = vmatmul.mubr.bf16.gmra.mrb[0].mxu0 %v820
        %v1231 = vpop.f32.mrb[0].mxu0
        %v1232 = vadd.f32 %v1007, %v1231
        %v1233 = vpop.f32.mrb[0].mxu0
        %v1234 = vpop.f32.mrb[0].mxu0
        %v1235 = vadd.f32 %v1010, %v1234
        %v1236 = vpop.f32.mrb[0].mxu0
        %1237 = vmatprep.mubr.bf16.mxu0 0
        %1238 = vmatmul.mubr.bf16.gmra.mrb[0].mxu0 %v823
        %v1239 = vpop.f32.mrb[0].mxu0
        %v1240 = vadd.f32 %v1015, %v1239
        %v1241 = vpop.f32.mrb[0].mxu0
        %v1242 = vpop.f32.mrb[0].mxu0
        %v1243 = vadd.f32 %v1018, %v1242
        %v1244 = vpop.f32.mrb[0].mxu0
        %1245 = vmatprep.mubr.bf16.mxu0 0
        %1246 = vmatmul.mubr.bf16.gmra.mrb[0].mxu0 %v826
        %v1247 = vpop.f32.mrb[0].mxu0
        %v1248 = vadd.f32 %v1023, %v1247
        %v1249 = vpop.f32.mrb[0].mxu0
        %v1250 = vpop.f32.mrb[0].mxu0
        %v1251 = vadd.f32 %v1026, %v1250
        %v1252 = vpop.f32.mrb[0].mxu0
        %1253 = vmatprep.mubr.bf16.mxu0 0
        %1254 = vmatmul.mubr.bf16.gmra.mrb[0].mxu0 %v829
        %v1255 = vpop.f32.mrb[0].mxu0
        %v1256 = vadd.f32 %v1031, %v1255
        %v1257 = vpop.f32.mrb[0].mxu0
        %v1258 = vpop.f32.mrb[0].mxu0
        %v1259 = vadd.f32 %v1034, %v1258
        %v1260 = vpop.f32.mrb[0].mxu0
        %1261 = vmatprep.mubr.bf16.mxu0 0
        %1262 = vmatmul.mubr.bf16.gmra.mrb[0].mxu0 %v832
        %v1263 = vpop.f32.mrb[0].mxu0
        %v1264 = vadd.f32 %v1039, %v1263
        %v1265 = vpop.f32.mrb[0].mxu0
        %v1266 = vpop.f32.mrb[0].mxu0
        %v1267 = vadd.f32 %v1042, %v1266
        %v1268 = vpop.f32.mrb[0].mxu0
        %1269 = vmatprep.mubr.bf16.mxu0 0
        %1270 = vmatmul.mubr.bf16.gmra.mrb[0].mxu0 %v835
        %v1271 = vpop.f32.mrb[0].mxu0
        %v1272 = vadd.f32 %v1047, %v1271
        %v1273 = vpop.f32.mrb[0].mxu0
        %v1274 = vpop.f32.mrb[0].mxu0
        %v1275 = vadd.f32 %v1050, %v1274
        %v1276 = vpop.f32.mrb[0].mxu0
        %1277 = vmatprep.mubr.bf16.mxu0 0
        %1278 = vmatmul.mubr.bf16.gmra.mrb[0].mxu0 %v838
        %v1279 = vpop.f32.mrb[0].mxu0
        %v1280 = vadd.f32 %v1055, %v1279
        %v1281 = vpop.f32.mrb[0].mxu0
        %v1282 = vpop.f32.mrb[0].mxu0
        %v1283 = vadd.f32 %v1058, %v1282
        %v1284 = vpop.f32.mrb[0].mxu0
        %1285 = vmatprep.mubr.bf16.mxu0 0
        %1286 = vmatmul.mubr.bf16.gmra.mrb[0].mxu0 %v841
        %v1287 = vpop.f32.mrb[0].mxu0
        %v1288 = vadd.f32 %v1063, %v1287
        %v1289 = vpop.f32.mrb[0].mxu0
        %v1290 = vpop.f32.mrb[0].mxu0
        %v1291 = vadd.f32 %v1066, %v1290
        %v1292 = vpop.f32.mrb[0].mxu0
        %1293 = vmatprep.mubr.bf16.mxu0 0
        %1294 = vmatmul.mubr.bf16.gmra.mrb[0].mxu0 %v844
        %v1295 = vpop.f32.mrb[0].mxu0
        %v1296 = vadd.f32 %v1071, %v1295
        %v1297 = vpop.f32.mrb[0].mxu0
        %v1298 = vpop.f32.mrb[0].mxu0
        %v1299 = vadd.f32 %v1074, %v1298
        %v1300 = vpop.f32.mrb[0].mxu0
        %1301 = vmatprep.mubr.bf16.mxu0 0
        %1302 = vmatmul.mubr.bf16.gmra.mrb[0].mxu0 %v847
        %v1303 = vpop.f32.mrb[0].mxu0
        %v1304 = vadd.f32 %v1079, %v1303
        %v1305 = vpop.f32.mrb[0].mxu0
        %v1306 = vpop.f32.mrb[0].mxu0
        %v1307 = vadd.f32 %v1082, %v1306
        %v1308 = vpop.f32.mrb[0].mxu0
        %1309 = vmatprep.mubr.bf16.mxu0 0
        %1310 = vmatmul.mubr.bf16.gmra.mrb[0].mxu0 %v850
        %v1311 = vpop.f32.mrb[0].mxu0
        %v1312 = vadd.f32 %v1087, %v1311
        %v1313 = vpop.f32.mrb[0].mxu0
        %v1314 = vpop.f32.mrb[0].mxu0
        %v1315 = vadd.f32 %v1090, %v1314
        %v1316 = vpop.f32.mrb[0].mxu0
        %1317 = vmatprep.mubr.bf16.mxu0 0
        %1318 = vmatmul.mubr.bf16.gmra.mrb[0].mxu0 %v853
        %v1319 = vpop.f32.mrb[0].mxu0
        %v1320 = vadd.f32 %v1095, %v1319
        %v1321 = vpop.f32.mrb[0].mxu0
        %v1322 = vpop.f32.mrb[0].mxu0
        %v1323 = vadd.f32 %v1098, %v1322
        %v1324 = vpop.f32.mrb[0].mxu0
        %1325 = vmatprep.mubr.bf16.mxu0 0
        %1326 = vmatmul.mubr.bf16.gmra.mrb[0].mxu0 %v856
        %v1327 = vpop.f32.mrb[0].mxu0
        %v1328 = vadd.f32 %v1103, %v1327
        %v1329 = vpop.f32.mrb[0].mxu0
        %v1330 = vpop.f32.mrb[0].mxu0
        %v1331 = vadd.f32 %v1106, %v1330
        %v1332 = vpop.f32.mrb[0].mxu0
        %1333 = vmatprep.mubr.bf16.mxu0 0
        %1334 = vmatmul.mubr.bf16.gmra.mrb[0].mxu0 %v859
        %v1335 = vpop.f32.mrb[0].mxu0
        %v1336 = vadd.f32 %v1111, %v1335
        %v1337 = vpop.f32.mrb[0].mxu0
        %v1338 = vpop.f32.mrb[0].mxu0
        %v1339 = vadd.f32 %v1114, %v1338
        %v1340 = vpop.f32.mrb[0].mxu0
        %1341 = vmatprep.mubr.bf16.mxu0 0
        %1342 = vmatmul.mubr.bf16.gmra.mrb[0].mxu0 %v862
        %v1343 = vpop.f32.mrb[0].mxu0
        %v1344 = vadd.f32 %v1119, %v1343
        %v1345 = vpop.f32.mrb[0].mxu0
        %v1346 = vpop.f32.mrb[0].mxu0
        %v1347 = vadd.f32 %v1122, %v1346
        %v1348 = vpop.f32.mrb[0].mxu0
        %1349 = vmatprep.mubr.bf16.mxu0 0
        %1350 = vmatmul.mubr.bf16.gmra.mrb[0].mxu0 %v865
        %v1351 = vpop.f32.mrb[0].mxu0
        %v1352 = vadd.f32 %v1127, %v1351
        %v1353 = vpop.f32.mrb[0].mxu0
        %v1354 = vpop.f32.mrb[0].mxu0
        %v1355 = vadd.f32 %v1130, %v1354
        %v1356 = vpop.f32.mrb[0].mxu0
        %1357 = vmatprep.mubr.bf16.mxu0 0
        %1358 = vmatmul.mubr.bf16.gmra.mrb[0].mxu0 %v868
        %v1359 = vpop.f32.mrb[0].mxu0
        %v1360 = vadd.f32 %v1135, %v1359
        %v1361 = vpop.f32.mrb[0].mxu0
        %v1362 = vpop.f32.mrb[0].mxu0
        %v1363 = vadd.f32 %v1138, %v1362
        %v1364 = vpop.f32.mrb[0].mxu0
        %1365 = vmatprep.mubr.bf16.mxu0 0
        %1366 = vmatmul.mubr.bf16.gmra.mrb[0].mxu0 %v871
        %v1367 = vpop.f32.mrb[0].mxu0
        %v1368 = vadd.f32 %v1143, %v1367
        %v1369 = vpop.f32.mrb[0].mxu0
        %v1370 = vpop.f32.mrb[0].mxu0
        %v1371 = vadd.f32 %v1146, %v1370
        %v1372 = vpop.f32.mrb[0].mxu0
        %1373 = vmatprep.mubr.bf16.mxu0 0
        %1374 = vmatmul.mubr.bf16.gmra.mrb[0].mxu0 %v874
        %v1375 = vpop.f32.mrb[0].mxu0
        %v1376 = vadd.f32 %v1151, %v1375
        %v1377 = vpop.f32.mrb[0].mxu0
        %v1378 = vpop.f32.mrb[0].mxu0
        %v1379 = vadd.f32 %v1154, %v1378
        %v1380 = vpop.f32.mrb[0].mxu0
        %1381 = vmatprep.mubr.bf16.mxu0 0
        %1382 = vmatmul.mubr.bf16.gmra.mrb[0].mxu0 %v877
        %v1383 = vpop.f32.mrb[0].mxu0
        %v1384 = vadd.f32 %v1159, %v1383
        %v1385 = vpop.f32.mrb[0].mxu0
        %v1386 = vpop.f32.mrb[0].mxu0
        %v1387 = vadd.f32 %v1162, %v1386
        %v1388 = vpop.f32.mrb[0].mxu0
        %1389 = vmatprep.mubr.bf16.mxu0 0
        %1390 = vmatmul.mubr.bf16.gmra.mrb[0].mxu0 %v880
        %v1391 = vpop.f32.mrb[0].mxu0
        %v1392 = vadd.f32 %v1167, %v1391
        %v1393 = vpop.f32.mrb[0].mxu0
        %v1394 = vpop.f32.mrb[0].mxu0
        %v1395 = vadd.f32 %v1170, %v1394
        %v1396 = vpop.f32.mrb[0].mxu0
        %1397 = vmatprep.mubr.bf16.mxu0 0
        %1398 = vmatmul.mubr.bf16.gmra.mrb[0].mxu0 %v883
        %v1399 = vpop.f32.mrb[0].mxu0
        %v1400 = vadd.f32 %v1175, %v1399
        %v1401 = vpop.f32.mrb[0].mxu0
        %v1402 = vpop.f32.mrb[0].mxu0
        %v1403 = vadd.f32 %v1178, %v1402
        %v1404 = vpop.f32.mrb[0].mxu0
        %1405 = vdwg.mxu0
        // Predicated region
        $region57: #{tpu_custom_call.1} parent=35 // pred_check
          %p1406 = pneg %p252
        $region58: #{tpu_custom_call.1} parent=35 // pred_check_branch
          %1408 = sbr.rel (%p1406) target = $region60
        $region59: #{tpu_custom_call.1} parent=35 // pred_region
          %1409 = vst [vmem:[#allocation4] sm:$0xff] %v1216
          %1410 = vst [vmem:[#allocation4 + $0x8] sm:$0xff] %v1219
          %1411 = vst [vmem:[#allocation4 + $0x10] sm:$0xff] %v1224
          %1412 = vst [vmem:[#allocation4 + $0x18] sm:$0xff] %v1227
          %1413 = vst [vmem:[#allocation4 + $0x20] sm:$0xff] %v1232
          %1414 = vst [vmem:[#allocation4 + $0x28] sm:$0xff] %v1235
          %1415 = vst [vmem:[#allocation4 + $0x30] sm:$0xff] %v1240
          %1416 = vst [vmem:[#allocation4 + $0x38] sm:$0xff] %v1243
          %1417 = vst [vmem:[#allocation4 + $0x40] sm:$0xff] %v1248
          %1418 = vst [vmem:[#allocation4 + $0x48] sm:$0xff] %v1251
          %1419 = vst [vmem:[#allocation4 + $0x50] sm:$0xff] %v1256
          %1420 = vst [vmem:[#allocation4 + $0x58] sm:$0xff] %v1259
          %1421 = vst [vmem:[#allocation4 + $0x60] sm:$0xff] %v1264
          %1422 = vst [vmem:[#allocation4 + $0x68] sm:$0xff] %v1267
          %1423 = vst [vmem:[#allocation4 + $0x70] sm:$0xff] %v1272
          %1424 = vst [vmem:[#allocation4 + $0x78] sm:$0xff] %v1275
          %1425 = vst [vmem:[#allocation4 + $0x80] sm:$0xff] %v1280
          %1426 = vst [vmem:[#allocation4 + $0x88] sm:$0xff] %v1283
          %1427 = vst [vmem:[#allocation4 + $0x90] sm:$0xff] %v1288
          %1428 = vst [vmem:[#allocation4 + $0x98] sm:$0xff] %v1291
          %1429 = vst [vmem:[#allocation4 + $0xa0] sm:$0xff] %v1296
          %1430 = vst [vmem:[#allocation4 + $0xa8] sm:$0xff] %v1299
          %1431 = vst [vmem:[#allocation4 + $0xb0] sm:$0xff] %v1304
          %1432 = vst [vmem:[#allocation4 + $0xb8] sm:$0xff] %v1307
          %1433 = vst [vmem:[#allocation4 + $0xc0] sm:$0xff] %v1312
          %1434 = vst [vmem:[#allocation4 + $0xc8] sm:$0xff] %v1315
          %1435 = vst [vmem:[#allocation4 + $0xd0] sm:$0xff] %v1320
          %1436 = vst [vmem:[#allocation4 + $0xd8] sm:$0xff] %v1323
          %1437 = vst [vmem:[#allocation4 + $0xe0] sm:$0xff] %v1328
          %1438 = vst [vmem:[#allocation4 + $0xe8] sm:$0xff] %v1331
          %1439 = vst [vmem:[#allocation4 + $0xf0] sm:$0xff] %v1336
          %1440 = vst [vmem:[#allocation4 + $0xf8] sm:$0xff] %v1339
          %1441 = vst [vmem:[#allocation4 + $0x100] sm:$0xff] %v1344
          %1442 = vst [vmem:[#allocation4 + $0x108] sm:$0xff] %v1347
          %1443 = vst [vmem:[#allocation4 + $0x110] sm:$0xff] %v1352
          %1444 = vst [vmem:[#allocation4 + $0x118] sm:$0xff] %v1355
          %1445 = vst [vmem:[#allocation4 + $0x120] sm:$0xff] %v1360
          %1446 = vst [vmem:[#allocation4 + $0x128] sm:$0xff] %v1363
          %1447 = vst [vmem:[#allocation4 + $0x130] sm:$0xff] %v1368
          %1448 = vst [vmem:[#allocation4 + $0x138] sm:$0xff] %v1371
          %1449 = vst [vmem:[#allocation4 + $0x140] sm:$0xff] %v1376
          %1450 = vst [vmem:[#allocation4 + $0x148] sm:$0xff] %v1379
          %1451 = vst [vmem:[#allocation4 + $0x150] sm:$0xff] %v1384
          %1452 = vst [vmem:[#allocation4 + $0x158] sm:$0xff] %v1387
          %1453 = vst [vmem:[#allocation4 + $0x160] sm:$0xff] %v1392
          %1454 = vst [vmem:[#allocation4 + $0x168] sm:$0xff] %v1395
          %1455 = vst [vmem:[#allocation4 + $0x170] sm:$0xff] %v1400
          %1456 = vst [vmem:[#allocation4 + $0x178] sm:$0xff] %v1403
        $region60: #{tpu_custom_call.1} parent=35 // pred_fallthru
          _
        %p1457 = scmp.ne.s32.totalorder %s27, 0
        // Predicated region
        $region61: #{tpu_custom_call.1} parent=35 // pred_check
          %p1458 = pneg %p1457
        $region62: #{tpu_custom_call.1} parent=35 // pred_check_branch
          %1460 = sbr.rel (%p1458) target = $region64
        $region63: #{tpu_custom_call.1} parent=35 // pred_region
          %v1461 = vld [vmem:[#allocation4] sm:$0xff]
          %v1462 = vld [vmem:[#allocation4 + $0x8] sm:$0xff]
          %v1463 = vld [vmem:[#allocation4 + $0x10] sm:$0xff]
          %v1464 = vld [vmem:[#allocation4 + $0x18] sm:$0xff]
          %v1465 = vld [vmem:[#allocation4 + $0x20] sm:$0xff]
          %v1466 = vld [vmem:[#allocation4 + $0x28] sm:$0xff]
          %v1467 = vld [vmem:[#allocation4 + $0x30] sm:$0xff]
          %v1468 = vld [vmem:[#allocation4 + $0x38] sm:$0xff]
          %v1469 = vld [vmem:[#allocation4 + $0x40] sm:$0xff]
          %v1470 = vld [vmem:[#allocation4 + $0x48] sm:$0xff]
          %v1471 = vld [vmem:[#allocation4 + $0x50] sm:$0xff]
          %v1472 = vld [vmem:[#allocation4 + $0x58] sm:$0xff]
          %v1473 = vld [vmem:[#allocation4 + $0x60] sm:$0xff]
          %v1474 = vld [vmem:[#allocation4 + $0x68] sm:$0xff]
          %v1475 = vld [vmem:[#allocation4 + $0x70] sm:$0xff]
          %v1476 = vld [vmem:[#allocation4 + $0x78] sm:$0xff]
          %v1477 = vld [vmem:[#allocation4 + $0x80] sm:$0xff]
          %v1478 = vld [vmem:[#allocation4 + $0x88] sm:$0xff]
          %v1479 = vld [vmem:[#allocation4 + $0x90] sm:$0xff]
          %v1480 = vld [vmem:[#allocation4 + $0x98] sm:$0xff]
          %v1481 = vld [vmem:[#allocation4 + $0xa0] sm:$0xff]
          %v1482 = vld [vmem:[#allocation4 + $0xa8] sm:$0xff]
          %v1483 = vld [vmem:[#allocation4 + $0xb0] sm:$0xff]
          %v1484 = vld [vmem:[#allocation4 + $0xb8] sm:$0xff]
          %v1485 = vld [vmem:[#allocation4 + $0xc0] sm:$0xff]
          %v1486 = vld [vmem:[#allocation4 + $0xc8] sm:$0xff]
          %v1487 = vld [vmem:[#allocation4 + $0xd0] sm:$0xff]
          %v1488 = vld [vmem:[#allocation4 + $0xd8] sm:$0xff]
          %v1489 = vld [vmem:[#allocation4 + $0xe0] sm:$0xff]
          %v1490 = vld [vmem:[#allocation4 + $0xe8] sm:$0xff]
          %v1491 = vld [vmem:[#allocation4 + $0xf0] sm:$0xff]
          %v1492 = vld [vmem:[#allocation4 + $0xf8] sm:$0xff]
          %v1493 = vld [vmem:[#allocation4 + $0x100] sm:$0xff]
          %v1494 = vld [vmem:[#allocation4 + $0x108] sm:$0xff]
          %v1495 = vld [vmem:[#allocation4 + $0x110] sm:$0xff]
          %v1496 = vld [vmem:[#allocation4 + $0x118] sm:$0xff]
          %v1497 = vld [vmem:[#allocation4 + $0x120] sm:$0xff]
          %v1498 = vld [vmem:[#allocation4 + $0x128] sm:$0xff]
          %v1499 = vld [vmem:[#allocation4 + $0x130] sm:$0xff]
          %v1500 = vld [vmem:[#allocation4 + $0x138] sm:$0xff]
          %v1501 = vld [vmem:[#allocation4 + $0x140] sm:$0xff]
          %v1502 = vld [vmem:[#allocation4 + $0x148] sm:$0xff]
          %v1503 = vld [vmem:[#allocation4 + $0x150] sm:$0xff]
          %v1504 = vld [vmem:[#allocation4 + $0x158] sm:$0xff]
          %v1505 = vld [vmem:[#allocation4 + $0x160] sm:$0xff]
          %v1506 = vld [vmem:[#allocation4 + $0x168] sm:$0xff]
          %v1507 = vld [vmem:[#allocation4 + $0x170] sm:$0xff]
          %v1508 = vld [vmem:[#allocation4 + $0x178] sm:$0xff]
          %v1509 = vadd.f32 %v1461, %v1216
          %v1510 = vadd.f32 %v1462, %v1219
          %v1511 = vadd.f32 %v1463, %v1224
          %v1512 = vadd.f32 %v1464, %v1227
          %v1513 = vadd.f32 %v1465, %v1232
          %v1514 = vadd.f32 %v1466, %v1235
          %v1515 = vadd.f32 %v1467, %v1240
          %v1516 = vadd.f32 %v1468, %v1243
          %v1517 = vadd.f32 %v1469, %v1248
          %v1518 = vadd.f32 %v1470, %v1251
          %v1519 = vadd.f32 %v1471, %v1256
          %v1520 = vadd.f32 %v1472, %v1259
          %v1521 = vadd.f32 %v1473, %v1264
          %v1522 = vadd.f32 %v1474, %v1267
          %v1523 = vadd.f32 %v1475, %v1272
          %v1524 = vadd.f32 %v1476, %v1275
          %v1525 = vadd.f32 %v1477, %v1280
          %v1526 = vadd.f32 %v1478, %v1283
          %v1527 = vadd.f32 %v1479, %v1288
          %v1528 = vadd.f32 %v1480, %v1291
          %v1529 = vadd.f32 %v1481, %v1296
          %v1530 = vadd.f32 %v1482, %v1299
          %v1531 = vadd.f32 %v1483, %v1304
          %v1532 = vadd.f32 %v1484, %v1307
          %v1533 = vadd.f32 %v1485, %v1312
          %v1534 = vadd.f32 %v1486, %v1315
          %v1535 = vadd.f32 %v1487, %v1320
          %v1536 = vadd.f32 %v1488, %v1323
          %v1537 = vadd.f32 %v1489, %v1328
          %v1538 = vadd.f32 %v1490, %v1331
          %v1539 = vadd.f32 %v1491, %v1336
          %v1540 = vadd.f32 %v1492, %v1339
          %v1541 = vadd.f32 %v1493, %v1344
          %v1542 = vadd.f32 %v1494, %v1347
          %v1543 = vadd.f32 %v1495, %v1352
          %v1544 = vadd.f32 %v1496, %v1355
          %v1545 = vadd.f32 %v1497, %v1360
          %v1546 = vadd.f32 %v1498, %v1363
          %v1547 = vadd.f32 %v1499, %v1368
          %v1548 = vadd.f32 %v1500, %v1371
          %v1549 = vadd.f32 %v1501, %v1376
          %v1550 = vadd.f32 %v1502, %v1379
          %v1551 = vadd.f32 %v1503, %v1384
          %v1552 = vadd.f32 %v1504, %v1387
          %v1553 = vadd.f32 %v1505, %v1392
          %v1554 = vadd.f32 %v1506, %v1395
          %v1555 = vadd.f32 %v1507, %v1400
          %v1556 = vadd.f32 %v1508, %v1403
          %1557 = vst [vmem:[#allocation4] sm:$0xff] %v1509
          %1558 = vst [vmem:[#allocation4 + $0x8] sm:$0xff] %v1510
          %1559 = vst [vmem:[#allocation4 + $0x10] sm:$0xff] %v1511
          %1560 = vst [vmem:[#allocation4 + $0x18] sm:$0xff] %v1512
          %1561 = vst [vmem:[#allocation4 + $0x20] sm:$0xff] %v1513
          %1562 = vst [vmem:[#allocation4 + $0x28] sm:$0xff] %v1514
          %1563 = vst [vmem:[#allocation4 + $0x30] sm:$0xff] %v1515
          %1564 = vst [vmem:[#allocation4 + $0x38] sm:$0xff] %v1516
          %1565 = vst [vmem:[#allocation4 + $0x40] sm:$0xff] %v1517
          %1566 = vst [vmem:[#allocation4 + $0x48] sm:$0xff] %v1518
          %1567 = vst [vmem:[#allocation4 + $0x50] sm:$0xff] %v1519
          %1568 = vst [vmem:[#allocation4 + $0x58] sm:$0xff] %v1520
          %1569 = vst [vmem:[#allocation4 + $0x60] sm:$0xff] %v1521
          %1570 = vst [vmem:[#allocation4 + $0x68] sm:$0xff] %v1522
          %1571 = vst [vmem:[#allocation4 + $0x70] sm:$0xff] %v1523
          %1572 = vst [vmem:[#allocation4 + $0x78] sm:$0xff] %v1524
          %1573 = vst [vmem:[#allocation4 + $0x80] sm:$0xff] %v1525
          %1574 = vst [vmem:[#allocation4 + $0x88] sm:$0xff] %v1526
          %1575 = vst [vmem:[#allocation4 + $0x90] sm:$0xff] %v1527
          %1576 = vst [vmem:[#allocation4 + $0x98] sm:$0xff] %v1528
          %1577 = vst [vmem:[#allocation4 + $0xa0] sm:$0xff] %v1529
          %1578 = vst [vmem:[#allocation4 + $0xa8] sm:$0xff] %v1530
          %1579 = vst [vmem:[#allocation4 + $0xb0] sm:$0xff] %v1531
          %1580 = vst [vmem:[#allocation4 + $0xb8] sm:$0xff] %v1532
          %1581 = vst [vmem:[#allocation4 + $0xc0] sm:$0xff] %v1533
          %1582 = vst [vmem:[#allocation4 + $0xc8] sm:$0xff] %v1534
          %1583 = vst [vmem:[#allocation4 + $0xd0] sm:$0xff] %v1535
          %1584 = vst [vmem:[#allocation4 + $0xd8] sm:$0xff] %v1536
          %1585 = vst [vmem:[#allocation4 + $0xe0] sm:$0xff] %v1537
          %1586 = vst [vmem:[#allocation4 + $0xe8] sm:$0xff] %v1538
          %1587 = vst [vmem:[#allocation4 + $0xf0] sm:$0xff] %v1539
          %1588 = vst [vmem:[#allocation4 + $0xf8] sm:$0xff] %v1540
          %1589 = vst [vmem:[#allocation4 + $0x100] sm:$0xff] %v1541
          %1590 = vst [vmem:[#allocation4 + $0x108] sm:$0xff] %v1542
          %1591 = vst [vmem:[#allocation4 + $0x110] sm:$0xff] %v1543
          %1592 = vst [vmem:[#allocation4 + $0x118] sm:$0xff] %v1544
          %1593 = vst [vmem:[#allocation4 + $0x120] sm:$0xff] %v1545
          %1594 = vst [vmem:[#allocation4 + $0x128] sm:$0xff] %v1546
          %1595 = vst [vmem:[#allocation4 + $0x130] sm:$0xff] %v1547
          %1596 = vst [vmem:[#allocation4 + $0x138] sm:$0xff] %v1548
          %1597 = vst [vmem:[#allocation4 + $0x140] sm:$0xff] %v1549
          %1598 = vst [vmem:[#allocation4 + $0x148] sm:$0xff] %v1550
          %1599 = vst [vmem:[#allocation4 + $0x150] sm:$0xff] %v1551
          %1600 = vst [vmem:[#allocation4 + $0x158] sm:$0xff] %v1552
          %1601 = vst [vmem:[#allocation4 + $0x160] sm:$0xff] %v1553
          %1602 = vst [vmem:[#allocation4 + $0x168] sm:$0xff] %v1554
          %1603 = vst [vmem:[#allocation4 + $0x170] sm:$0xff] %v1555
          %1604 = vst [vmem:[#allocation4 + $0x178] sm:$0xff] %v1556
        $region64: #{tpu_custom_call.1} parent=35 // pred_fallthru
          _
        // Predicated region
        $region65: #{tpu_custom_call.1} parent=35 // pred_check
          %p1605 = pneg %p252
        $region66: #{tpu_custom_call.1} parent=35 // pred_check_branch
          %1607 = sbr.rel (%p1605) target = $region68
        $region67: #{tpu_custom_call.1} parent=35 // pred_region
          %v1608 = vld [vmem:[#allocation4] sm:$0xff]
          %v1609 = vld [vmem:[#allocation4 + $0x8] sm:$0xff]
          %v1610 = vld [vmem:[#allocation4 + $0x10] sm:$0xff]
          %v1611 = vld [vmem:[#allocation4 + $0x18] sm:$0xff]
          %v1612 = vld [vmem:[#allocation4 + $0x20] sm:$0xff]
          %v1613 = vld [vmem:[#allocation4 + $0x28] sm:$0xff]
          %v1614 = vld [vmem:[#allocation4 + $0x30] sm:$0xff]
          %v1615 = vld [vmem:[#allocation4 + $0x38] sm:$0xff]
          %v1616 = vld [vmem:[#allocation4 + $0x40] sm:$0xff]
          %v1617 = vld [vmem:[#allocation4 + $0x48] sm:$0xff]
          %v1618 = vld [vmem:[#allocation4 + $0x50] sm:$0xff]
          %v1619 = vld [vmem:[#allocation4 + $0x58] sm:$0xff]
          %v1620 = vld [vmem:[#allocation4 + $0x60] sm:$0xff]
          %v1621 = vld [vmem:[#allocation4 + $0x68] sm:$0xff]
          %v1622 = vld [vmem:[#allocation4 + $0x70] sm:$0xff]
          %v1623 = vld [vmem:[#allocation4 + $0x78] sm:$0xff]
          %v1624 = vld [vmem:[#allocation4 + $0x80] sm:$0xff]
          %v1625 = vld [vmem:[#allocation4 + $0x88] sm:$0xff]
          %v1626 = vld [vmem:[#allocation4 + $0x90] sm:$0xff]
          %v1627 = vld [vmem:[#allocation4 + $0x98] sm:$0xff]
          %v1628 = vld [vmem:[#allocation4 + $0xa0] sm:$0xff]
          %v1629 = vld [vmem:[#allocation4 + $0xa8] sm:$0xff]
          %v1630 = vld [vmem:[#allocation4 + $0xb0] sm:$0xff]
          %v1631 = vld [vmem:[#allocation4 + $0xb8] sm:$0xff]
          %v1632 = vld [vmem:[#allocation4 + $0xc0] sm:$0xff]
          %v1633 = vld [vmem:[#allocation4 + $0xc8] sm:$0xff]
          %v1634 = vld [vmem:[#allocation4 + $0xd0] sm:$0xff]
          %v1635 = vld [vmem:[#allocation4 + $0xd8] sm:$0xff]
          %v1636 = vld [vmem:[#allocation4 + $0xe0] sm:$0xff]
          %v1637 = vld [vmem:[#allocation4 + $0xe8] sm:$0xff]
          %v1638 = vld [vmem:[#allocation4 + $0xf0] sm:$0xff]
          %v1639 = vld [vmem:[#allocation4 + $0xf8] sm:$0xff]
          %v1640 = vld [vmem:[#allocation4 + $0x100] sm:$0xff]
          %v1641 = vld [vmem:[#allocation4 + $0x108] sm:$0xff]
          %v1642 = vld [vmem:[#allocation4 + $0x110] sm:$0xff]
          %v1643 = vld [vmem:[#allocation4 + $0x118] sm:$0xff]
          %v1644 = vld [vmem:[#allocation4 + $0x120] sm:$0xff]
          %v1645 = vld [vmem:[#allocation4 + $0x128] sm:$0xff]
          %v1646 = vld [vmem:[#allocation4 + $0x130] sm:$0xff]
          %v1647 = vld [vmem:[#allocation4 + $0x138] sm:$0xff]
          %v1648 = vld [vmem:[#allocation4 + $0x140] sm:$0xff]
          %v1649 = vld [vmem:[#allocation4 + $0x148] sm:$0xff]
          %v1650 = vld [vmem:[#allocation4 + $0x150] sm:$0xff]
          %v1651 = vld [vmem:[#allocation4 + $0x158] sm:$0xff]
          %v1652 = vld [vmem:[#allocation4 + $0x160] sm:$0xff]
          %v1653 = vld [vmem:[#allocation4 + $0x168] sm:$0xff]
          %v1654 = vld [vmem:[#allocation4 + $0x170] sm:$0xff]
          %v1655 = vld [vmem:[#allocation4 + $0x178] sm:$0xff]
          %s1656 = sand.u32 %s25, 1
          %s1657 = smul.u32 %s1656, 384
          %s1658 = smul.u32 %s26, 384
          %s1659 = sadd.s32 %s1657, %s1658
          %v1660 = vpack.c.bf16 %v1609, %v1608
          %v1661 = vpack.c.bf16 %v1611, %v1610
          %v1662 = vpack.c.bf16 %v1613, %v1612
          %v1663 = vpack.c.bf16 %v1615, %v1614
          %v1664 = vpack.c.bf16 %v1617, %v1616
          %v1665 = vpack.c.bf16 %v1619, %v1618
          %v1666 = vpack.c.bf16 %v1621, %v1620
          %v1667 = vpack.c.bf16 %v1623, %v1622
          %v1668 = vpack.c.bf16 %v1625, %v1624
          %v1669 = vpack.c.bf16 %v1627, %v1626
          %v1670 = vpack.c.bf16 %v1629, %v1628
          %v1671 = vpack.c.bf16 %v1631, %v1630
          %v1672 = vpack.c.bf16 %v1633, %v1632
          %v1673 = vpack.c.bf16 %v1635, %v1634
          %v1674 = vpack.c.bf16 %v1637, %v1636
          %v1675 = vpack.c.bf16 %v1639, %v1638
          %v1676 = vpack.c.bf16 %v1641, %v1640
          %v1677 = vpack.c.bf16 %v1643, %v1642
          %v1678 = vpack.c.bf16 %v1645, %v1644
          %v1679 = vpack.c.bf16 %v1647, %v1646
          %v1680 = vpack.c.bf16 %v1649, %v1648
          %v1681 = vpack.c.bf16 %v1651, %v1650
          %v1682 = vpack.c.bf16 %v1653, %v1652
          %v1683 = vpack.c.bf16 %v1655, %v1654
          %s1684 = sshra.s32 %s1659, 4
          %s1685 = sand.u32 %s1659, 15
          %s1686 = smul.addr %s1684, 8
          %s1687 = scalar_lea.vmem [#allocation2], %s1686
          %1688 = vst [vmem:[%s1687] sm:$0xff] %v1660
          %1689 = vst [vmem:[%s1687 + $0x8] sm:$0xff] %v1661
          %1690 = vst [vmem:[%s1687 + $0x10] sm:$0xff] %v1662
          %1691 = vst [vmem:[%s1687 + $0x18] sm:$0xff] %v1663
          %1692 = vst [vmem:[%s1687 + $0x20] sm:$0xff] %v1664
          %1693 = vst [vmem:[%s1687 + $0x28] sm:$0xff] %v1665
          %1694 = vst [vmem:[%s1687 + $0x30] sm:$0xff] %v1666
          %1695 = vst [vmem:[%s1687 + $0x38] sm:$0xff] %v1667
          %1696 = vst [vmem:[%s1687 + $0x40] sm:$0xff] %v1668
          %1697 = vst [vmem:[%s1687 + $0x48] sm:$0xff] %v1669
          %1698 = vst [vmem:[%s1687 + $0x50] sm:$0xff] %v1670
          %1699 = vst [vmem:[%s1687 + $0x58] sm:$0xff] %v1671
          %1700 = vst [vmem:[%s1687 + $0x60] sm:$0xff] %v1672
          %1701 = vst [vmem:[%s1687 + $0x68] sm:$0xff] %v1673
          %1702 = vst [vmem:[%s1687 + $0x70] sm:$0xff] %v1674
          %1703 = vst [vmem:[%s1687 + $0x78] sm:$0xff] %v1675
          %1704 = vst [vmem:[%s1687 + $0x80] sm:$0xff] %v1676
          %1705 = vst [vmem:[%s1687 + $0x88] sm:$0xff] %v1677
          %1706 = vst [vmem:[%s1687 + $0x90] sm:$0xff] %v1678
          %1707 = vst [vmem:[%s1687 + $0x98] sm:$0xff] %v1679
          %1708 = vst [vmem:[%s1687 + $0xa0] sm:$0xff] %v1680
          %1709 = vst [vmem:[%s1687 + $0xa8] sm:$0xff] %v1681
          %1710 = vst [vmem:[%s1687 + $0xb0] sm:$0xff] %v1682
          %1711 = vst [vmem:[%s1687 + $0xb8] sm:$0xff] %v1683
          %s1712 = scalar_lea.vmem [#allocation3], %s1658
          %v1713 = vld [vmem:[%s1712] sm:$0xff]
          %v1714 = vld [vmem:[%s1712 + $0x8] sm:$0xff]
          %v1715 = vld [vmem:[%s1712 + $0x10] sm:$0xff]
          %v1716 = vld [vmem:[%s1712 + $0x18] sm:$0xff]
          %v1717 = vld [vmem:[%s1712 + $0x20] sm:$0xff]
          %v1718 = vld [vmem:[%s1712 + $0x28] sm:$0xff]
          %v1719 = vld [vmem:[%s1712 + $0x30] sm:$0xff]
          %v1720 = vld [vmem:[%s1712 + $0x38] sm:$0xff]
          %v1721 = vld [vmem:[%s1712 + $0x40] sm:$0xff]
          %v1722 = vld [vmem:[%s1712 + $0x48] sm:$0xff]
          %v1723 = vld [vmem:[%s1712 + $0x50] sm:$0xff]
          %v1724 = vld [vmem:[%s1712 + $0x58] sm:$0xff]
          %v1725 = vld [vmem:[%s1712 + $0x60] sm:$0xff]
          %v1726 = vld [vmem:[%s1712 + $0x68] sm:$0xff]
          %v1727 = vld [vmem:[%s1712 + $0x70] sm:$0xff]
          %v1728 = vld [vmem:[%s1712 + $0x78] sm:$0xff]
          %v1729 = vld [vmem:[%s1712 + $0x80] sm:$0xff]
          %v1730 = vld [vmem:[%s1712 + $0x88] sm:$0xff]
          %v1731 = vld [vmem:[%s1712 + $0x90] sm:$0xff]
          %v1732 = vld [vmem:[%s1712 + $0x98] sm:$0xff]
          %v1733 = vld [vmem:[%s1712 + $0xa0] sm:$0xff]
          %v1734 = vld [vmem:[%s1712 + $0xa8] sm:$0xff]
          %v1735 = vld [vmem:[%s1712 + $0xb0] sm:$0xff]
          %v1736 = vld [vmem:[%s1712 + $0xb8] sm:$0xff]
          %v1737 = vld [vmem:[%s1712 + $0xc0] sm:$0xff]
          %v1738 = vld [vmem:[%s1712 + $0xc8] sm:$0xff]
          %v1739 = vld [vmem:[%s1712 + $0xd0] sm:$0xff]
          %v1740 = vld [vmem:[%s1712 + $0xd8] sm:$0xff]
          %v1741 = vld [vmem:[%s1712 + $0xe0] sm:$0xff]
          %v1742 = vld [vmem:[%s1712 + $0xe8] sm:$0xff]
          %v1743 = vld [vmem:[%s1712 + $0xf0] sm:$0xff]
          %v1744 = vld [vmem:[%s1712 + $0xf8] sm:$0xff]
          %v1745 = vld [vmem:[%s1712 + $0x100] sm:$0xff]
          %v1746 = vld [vmem:[%s1712 + $0x108] sm:$0xff]
          %v1747 = vld [vmem:[%s1712 + $0x110] sm:$0xff]
          %v1748 = vld [vmem:[%s1712 + $0x118] sm:$0xff]
          %v1749 = vld [vmem:[%s1712 + $0x120] sm:$0xff]
          %v1750 = vld [vmem:[%s1712 + $0x128] sm:$0xff]
          %v1751 = vld [vmem:[%s1712 + $0x130] sm:$0xff]
          %v1752 = vld [vmem:[%s1712 + $0x138] sm:$0xff]
          %v1753 = vld [vmem:[%s1712 + $0x140] sm:$0xff]
          %v1754 = vld [vmem:[%s1712 + $0x148] sm:$0xff]
          %v1755 = vld [vmem:[%s1712 + $0x150] sm:$0xff]
          %v1756 = vld [vmem:[%s1712 + $0x158] sm:$0xff]
          %v1757 = vld [vmem:[%s1712 + $0x160] sm:$0xff]
          %v1758 = vld [vmem:[%s1712 + $0x168] sm:$0xff]
          %v1759 = vld [vmem:[%s1712 + $0x170] sm:$0xff]
          %v1760 = vld [vmem:[%s1712 + $0x178] sm:$0xff]
          %s1761 = sld [smem:[#allocation6 + %s443]]
          %v1762 = vstv %s1761
          %v1763 = vmul.f32 %v1762, %v1608
          %v1764 = vmul.f32 %v1762, %v1609
          %v1765 = vmul.f32 %v1762, %v1610
          %v1766 = vmul.f32 %v1762, %v1611
          %v1767 = vmul.f32 %v1762, %v1612
          %v1768 = vmul.f32 %v1762, %v1613
          %v1769 = vmul.f32 %v1762, %v1614
          %v1770 = vmul.f32 %v1762, %v1615
          %v1771 = vmul.f32 %v1762, %v1616
          %v1772 = vmul.f32 %v1762, %v1617
          %v1773 = vmul.f32 %v1762, %v1618
          %v1774 = vmul.f32 %v1762, %v1619
          %v1775 = vmul.f32 %v1762, %v1620
          %v1776 = vmul.f32 %v1762, %v1621
          %v1777 = vmul.f32 %v1762, %v1622
          %v1778 = vmul.f32 %v1762, %v1623
          %v1779 = vmul.f32 %v1762, %v1624
          %v1780 = vmul.f32 %v1762, %v1625
          %v1781 = vmul.f32 %v1762, %v1626
          %v1782 = vmul.f32 %v1762, %v1627
          %v1783 = vmul.f32 %v1762, %v1628
          %v1784 = vmul.f32 %v1762, %v1629
          %v1785 = vmul.f32 %v1762, %v1630
          %v1786 = vmul.f32 %v1762, %v1631
          %v1787 = vmul.f32 %v1762, %v1632
          %v1788 = vmul.f32 %v1762, %v1633
          %v1789 = vmul.f32 %v1762, %v1634
          %v1790 = vmul.f32 %v1762, %v1635
          %v1791 = vmul.f32 %v1762, %v1636
          %v1792 = vmul.f32 %v1762, %v1637
          %v1793 = vmul.f32 %v1762, %v1638
          %v1794 = vmul.f32 %v1762, %v1639
          %v1795 = vmul.f32 %v1762, %v1640
          %v1796 = vmul.f32 %v1762, %v1641
          %v1797 = vmul.f32 %v1762, %v1642
          %v1798 = vmul.f32 %v1762, %v1643
          %v1799 = vmul.f32 %v1762, %v1644
          %v1800 = vmul.f32 %v1762, %v1645
          %v1801 = vmul.f32 %v1762, %v1646
          %v1802 = vmul.f32 %v1762, %v1647
          %v1803 = vmul.f32 %v1762, %v1648
          %v1804 = vmul.f32 %v1762, %v1649
          %v1805 = vmul.f32 %v1762, %v1650
          %v1806 = vmul.f32 %v1762, %v1651
          %v1807 = vmul.f32 %v1762, %v1652
          %v1808 = vmul.f32 %v1762, %v1653
          %v1809 = vmul.f32 %v1762, %v1654
          %v1810 = vmul.f32 %v1762, %v1655
          %v1811 = vadd.f32 %v1713, %v1763
          %v1812 = vadd.f32 %v1714, %v1764
          %v1813 = vadd.f32 %v1715, %v1765
          %v1814 = vadd.f32 %v1716, %v1766
          %v1815 = vadd.f32 %v1717, %v1767
          %v1816 = vadd.f32 %v1718, %v1768
          %v1817 = vadd.f32 %v1719, %v1769
          %v1818 = vadd.f32 %v1720, %v1770
          %v1819 = vadd.f32 %v1721, %v1771
          %v1820 = vadd.f32 %v1722, %v1772
          %v1821 = vadd.f32 %v1723, %v1773
          %v1822 = vadd.f32 %v1724, %v1774
          %v1823 = vadd.f32 %v1725, %v1775
          %v1824 = vadd.f32 %v1726, %v1776
          %v1825 = vadd.f32 %v1727, %v1777
          %v1826 = vadd.f32 %v1728, %v1778
          %v1827 = vadd.f32 %v1729, %v1779
          %v1828 = vadd.f32 %v1730, %v1780
          %v1829 = vadd.f32 %v1731, %v1781
          %v1830 = vadd.f32 %v1732, %v1782
          %v1831 = vadd.f32 %v1733, %v1783
          %v1832 = vadd.f32 %v1734, %v1784
          %v1833 = vadd.f32 %v1735, %v1785
          %v1834 = vadd.f32 %v1736, %v1786
          %v1835 = vadd.f32 %v1737, %v1787
          %v1836 = vadd.f32 %v1738, %v1788
          %v1837 = vadd.f32 %v1739, %v1789
          %v1838 = vadd.f32 %v1740, %v1790
          %v1839 = vadd.f32 %v1741, %v1791
          %v1840 = vadd.f32 %v1742, %v1792
          %v1841 = vadd.f32 %v1743, %v1793
          %v1842 = vadd.f32 %v1744, %v1794
          %v1843 = vadd.f32 %v1745, %v1795
          %v1844 = vadd.f32 %v1746, %v1796
          %v1845 = vadd.f32 %v1747, %v1797
          %v1846 = vadd.f32 %v1748, %v1798
          %v1847 = vadd.f32 %v1749, %v1799
          %v1848 = vadd.f32 %v1750, %v1800
          %v1849 = vadd.f32 %v1751, %v1801
          %v1850 = vadd.f32 %v1752, %v1802
          %v1851 = vadd.f32 %v1753, %v1803
          %v1852 = vadd.f32 %v1754, %v1804
          %v1853 = vadd.f32 %v1755, %v1805
          %v1854 = vadd.f32 %v1756, %v1806
          %v1855 = vadd.f32 %v1757, %v1807
          %v1856 = vadd.f32 %v1758, %v1808
          %v1857 = vadd.f32 %v1759, %v1809
          %v1858 = vadd.f32 %v1760, %v1810
          %1859 = vst [vmem:[%s1712] sm:$0xff] %v1811
          %1860 = vst [vmem:[%s1712 + $0x8] sm:$0xff] %v1812
          %1861 = vst [vmem:[%s1712 + $0x10] sm:$0xff] %v1813
          %1862 = vst [vmem:[%s1712 + $0x18] sm:$0xff] %v1814
          %1863 = vst [vmem:[%s1712 + $0x20] sm:$0xff] %v1815
          %1864 = vst [vmem:[%s1712 + $0x28] sm:$0xff] %v1816
          %1865 = vst [vmem:[%s1712 + $0x30] sm:$0xff] %v1817
          %1866 = vst [vmem:[%s1712 + $0x38] sm:$0xff] %v1818
          %1867 = vst [vmem:[%s1712 + $0x40] sm:$0xff] %v1819
          %1868 = vst [vmem:[%s1712 + $0x48] sm:$0xff] %v1820
          %1869 = vst [vmem:[%s1712 + $0x50] sm:$0xff] %v1821
          %1870 = vst [vmem:[%s1712 + $0x58] sm:$0xff] %v1822
          %1871 = vst [vmem:[%s1712 + $0x60] sm:$0xff] %v1823
          %1872 = vst [vmem:[%s1712 + $0x68] sm:$0xff] %v1824
          %1873 = vst [vmem:[%s1712 + $0x70] sm:$0xff] %v1825
          %1874 = vst [vmem:[%s1712 + $0x78] sm:$0xff] %v1826
          %1875 = vst [vmem:[%s1712 + $0x80] sm:$0xff] %v1827
          %1876 = vst [vmem:[%s1712 + $0x88] sm:$0xff] %v1828
          %1877 = vst [vmem:[%s1712 + $0x90] sm:$0xff] %v1829
          %1878 = vst [vmem:[%s1712 + $0x98] sm:$0xff] %v1830
          %1879 = vst [vmem:[%s1712 + $0xa0] sm:$0xff] %v1831
          %1880 = vst [vmem:[%s1712 + $0xa8] sm:$0xff] %v1832
          %1881 = vst [vmem:[%s1712 + $0xb0] sm:$0xff] %v1833
          %1882 = vst [vmem:[%s1712 + $0xb8] sm:$0xff] %v1834
          %1883 = vst [vmem:[%s1712 + $0xc0] sm:$0xff] %v1835
          %1884 = vst [vmem:[%s1712 + $0xc8] sm:$0xff] %v1836
          %1885 = vst [vmem:[%s1712 + $0xd0] sm:$0xff] %v1837
          %1886 = vst [vmem:[%s1712 + $0xd8] sm:$0xff] %v1838
          %1887 = vst [vmem:[%s1712 + $0xe0] sm:$0xff] %v1839
          %1888 = vst [vmem:[%s1712 + $0xe8] sm:$0xff] %v1840
          %1889 = vst [vmem:[%s1712 + $0xf0] sm:$0xff] %v1841
          %1890 = vst [vmem:[%s1712 + $0xf8] sm:$0xff] %v1842
          %1891 = vst [vmem:[%s1712 + $0x100] sm:$0xff] %v1843
          %1892 = vst [vmem:[%s1712 + $0x108] sm:$0xff] %v1844
          %1893 = vst [vmem:[%s1712 + $0x110] sm:$0xff] %v1845
          %1894 = vst [vmem:[%s1712 + $0x118] sm:$0xff] %v1846
          %1895 = vst [vmem:[%s1712 + $0x120] sm:$0xff] %v1847
          %1896 = vst [vmem:[%s1712 + $0x128] sm:$0xff] %v1848
          %1897 = vst [vmem:[%s1712 + $0x130] sm:$0xff] %v1849
          %1898 = vst [vmem:[%s1712 + $0x138] sm:$0xff] %v1850
          %1899 = vst [vmem:[%s1712 + $0x140] sm:$0xff] %v1851
          %1900 = vst [vmem:[%s1712 + $0x148] sm:$0xff] %v1852
          %1901 = vst [vmem:[%s1712 + $0x150] sm:$0xff] %v1853
          %1902 = vst [vmem:[%s1712 + $0x158] sm:$0xff] %v1854
          %1903 = vst [vmem:[%s1712 + $0x160] sm:$0xff] %v1855
          %1904 = vst [vmem:[%s1712 + $0x168] sm:$0xff] %v1856
          %1905 = vst [vmem:[%s1712 + $0x170] sm:$0xff] %v1857
          %1906 = vst [vmem:[%s1712 + $0x178] sm:$0xff] %v1858
        $region68: #{tpu_custom_call.1} parent=35 // pred_fallthru
          _
        %p1907 = scmp.eq.s32.totalorder %s25, 1
        %p1908 = pnand %p252, %p1907
        %p1909 = pneg %p1908
        // Predicated region
        $region69: #{tpu_custom_call.1} parent=35 // pred_check
          _
        $region70: #{tpu_custom_call.1} parent=35 // pred_check_branch
          %1911 = sbr.rel (%p1908) target = $region72
        $region71: #{tpu_custom_call.1} parent=35 // pred_region
          %s1912 = smul.u32 %s26, 384
          %s1913 = scalar_lea.vmem [#allocation3], %s1912
          %v1914 = vld [vmem:[%s1913] sm:$0xff]
          %v1915 = vld [vmem:[%s1913 + $0x8] sm:$0xff]
          %v1916 = vld [vmem:[%s1913 + $0x10] sm:$0xff]
          %v1917 = vld [vmem:[%s1913 + $0x18] sm:$0xff]
          %v1918 = vld [vmem:[%s1913 + $0x20] sm:$0xff]
          %v1919 = vld [vmem:[%s1913 + $0x28] sm:$0xff]
          %v1920 = vld [vmem:[%s1913 + $0x30] sm:$0xff]
          %v1921 = vld [vmem:[%s1913 + $0x38] sm:$0xff]
          %v1922 = vld [vmem:[%s1913 + $0x40] sm:$0xff]
          %v1923 = vld [vmem:[%s1913 + $0x48] sm:$0xff]
          %v1924 = vld [vmem:[%s1913 + $0x50] sm:$0xff]
          %v1925 = vld [vmem:[%s1913 + $0x58] sm:$0xff]
          %v1926 = vld [vmem:[%s1913 + $0x60] sm:$0xff]
          %v1927 = vld [vmem:[%s1913 + $0x68] sm:$0xff]
          %v1928 = vld [vmem:[%s1913 + $0x70] sm:$0xff]
          %v1929 = vld [vmem:[%s1913 + $0x78] sm:$0xff]
          %v1930 = vld [vmem:[%s1913 + $0x80] sm:$0xff]
          %v1931 = vld [vmem:[%s1913 + $0x88] sm:$0xff]
          %v1932 = vld [vmem:[%s1913 + $0x90] sm:$0xff]
          %v1933 = vld [vmem:[%s1913 + $0x98] sm:$0xff]
          %v1934 = vld [vmem:[%s1913 + $0xa0] sm:$0xff]
          %v1935 = vld [vmem:[%s1913 + $0xa8] sm:$0xff]
          %v1936 = vld [vmem:[%s1913 + $0xb0] sm:$0xff]
          %v1937 = vld [vmem:[%s1913 + $0xb8] sm:$0xff]
          %v1938 = vld [vmem:[%s1913 + $0xc0] sm:$0xff]
          %v1939 = vld [vmem:[%s1913 + $0xc8] sm:$0xff]
          %v1940 = vld [vmem:[%s1913 + $0xd0] sm:$0xff]
          %v1941 = vld [vmem:[%s1913 + $0xd8] sm:$0xff]
          %v1942 = vld [vmem:[%s1913 + $0xe0] sm:$0xff]
          %v1943 = vld [vmem:[%s1913 + $0xe8] sm:$0xff]
          %v1944 = vld [vmem:[%s1913 + $0xf0] sm:$0xff]
          %v1945 = vld [vmem:[%s1913 + $0xf8] sm:$0xff]
          %v1946 = vld [vmem:[%s1913 + $0x100] sm:$0xff]
          %v1947 = vld [vmem:[%s1913 + $0x108] sm:$0xff]
          %v1948 = vld [vmem:[%s1913 + $0x110] sm:$0xff]
          %v1949 = vld [vmem:[%s1913 + $0x118] sm:$0xff]
          %v1950 = vld [vmem:[%s1913 + $0x120] sm:$0xff]
          %v1951 = vld [vmem:[%s1913 + $0x128] sm:$0xff]
          %v1952 = vld [vmem:[%s1913 + $0x130] sm:$0xff]
          %v1953 = vld [vmem:[%s1913 + $0x138] sm:$0xff]
          %v1954 = vld [vmem:[%s1913 + $0x140] sm:$0xff]
          %v1955 = vld [vmem:[%s1913 + $0x148] sm:$0xff]
          %v1956 = vld [vmem:[%s1913 + $0x150] sm:$0xff]
          %v1957 = vld [vmem:[%s1913 + $0x158] sm:$0xff]
          %v1958 = vld [vmem:[%s1913 + $0x160] sm:$0xff]
          %v1959 = vld [vmem:[%s1913 + $0x168] sm:$0xff]
          %v1960 = vld [vmem:[%s1913 + $0x170] sm:$0xff]
          %v1961 = vld [vmem:[%s1913 + $0x178] sm:$0xff]
          %v1962 = vpack.c.bf16 %v1915, %v1914
          %v1963 = vpack.c.bf16 %v1917, %v1916
          %v1964 = vpack.c.bf16 %v1919, %v1918
          %v1965 = vpack.c.bf16 %v1921, %v1920
          %v1966 = vpack.c.bf16 %v1923, %v1922
          %v1967 = vpack.c.bf16 %v1925, %v1924
          %v1968 = vpack.c.bf16 %v1927, %v1926
          %v1969 = vpack.c.bf16 %v1929, %v1928
          %v1970 = vpack.c.bf16 %v1931, %v1930
          %v1971 = vpack.c.bf16 %v1933, %v1932
          %v1972 = vpack.c.bf16 %v1935, %v1934
          %v1973 = vpack.c.bf16 %v1937, %v1936
          %v1974 = vpack.c.bf16 %v1939, %v1938
          %v1975 = vpack.c.bf16 %v1941, %v1940
          %v1976 = vpack.c.bf16 %v1943, %v1942
          %v1977 = vpack.c.bf16 %v1945, %v1944
          %v1978 = vpack.c.bf16 %v1947, %v1946
          %v1979 = vpack.c.bf16 %v1949, %v1948
          %v1980 = vpack.c.bf16 %v1951, %v1950
          %v1981 = vpack.c.bf16 %v1953, %v1952
          %v1982 = vpack.c.bf16 %v1955, %v1954
          %v1983 = vpack.c.bf16 %v1957, %v1956
          %v1984 = vpack.c.bf16 %v1959, %v1958
          %v1985 = vpack.c.bf16 %v1961, %v1960
          %v1986 = vld [vmem:[#allocation11] sm:$0xf]
          %v1987 = vld [vmem:[#allocation11 + $0x4] sm:$0xf]
          %v1988 = vld [vmem:[#allocation11 + $0x8] sm:$0xf]
          %v1989 = vld [vmem:[#allocation11 + $0xc] sm:$0xf]
          %v1990 = vld [vmem:[#allocation11 + $0x10] sm:$0xf]
          %v1991 = vld [vmem:[#allocation11 + $0x14] sm:$0xf]
          %v1992 = vld [vmem:[#allocation11 + $0x18] sm:$0xf]
          %v1993 = vld [vmem:[#allocation11 + $0x1c] sm:$0xf]
          %v1994 = vld [vmem:[#allocation11 + $0x20] sm:$0xf]
          %v1995 = vld [vmem:[#allocation11 + $0x24] sm:$0xf]
          %v1996 = vld [vmem:[#allocation11 + $0x28] sm:$0xf]
          %v1997 = vld [vmem:[#allocation11 + $0x2c] sm:$0xf]
          %v1998 = vld [vmem:[#allocation11 + $0x30] sm:$0xf]
          %v1999 = vld [vmem:[#allocation11 + $0x34] sm:$0xf]
          %v2000 = vld [vmem:[#allocation11 + $0x38] sm:$0xf]
          %v2001 = vld [vmem:[#allocation11 + $0x3c] sm:$0xf]
          %v2002 = vld [vmem:[%s3] sm:$0x1]
          %v2004 = vlaneseq
          %v2005 = vshrl.u32 %v2004, 7
          %v2006 = vsub.s32 0, %v2005
          %v2007 = vrot.slane %v2002, %v2006
          %v2025 = vunpack.c.l.b16 %v1986
          %v2026 = vunpack.c.l.b16 %v1987
          %v2027 = vunpack.c.l.b16 %v1988
          %v2028 = vunpack.c.l.b16 %v1989
          %v2029 = vunpack.c.l.b16 %v1990
          %v2030 = vunpack.c.l.b16 %v1991
          %v2031 = vunpack.c.l.b16 %v1992
          %v2032 = vunpack.c.l.b16 %v1993
          %v2033 = vunpack.c.l.b16 %v1994
          %v2034 = vunpack.c.l.b16 %v1995
          %v2035 = vunpack.c.l.b16 %v1996
          %v2036 = vunpack.c.l.b16 %v1997
          %v2037 = vunpack.c.l.b16 %v1998
          %v2038 = vunpack.c.l.b16 %v1999
          %v2039 = vunpack.c.l.b16 %v2000
          %v2040 = vunpack.c.l.b16 %v2001
          %v2041 = vpack.c.b16 %v2026, %v2025
          %v2042 = vpack.c.b16 %v2028, %v2027
          %v2043 = vpack.c.b16 %v2030, %v2029
          %v2044 = vpack.c.b16 %v2032, %v2031
          %v2045 = vpack.c.b16 %v2034, %v2033
          %v2046 = vpack.c.b16 %v2036, %v2035
          %v2047 = vpack.c.b16 %v2038, %v2037
          %v2048 = vpack.c.b16 %v2040, %v2039
          %2057 = vmatprep.subr.bf16.mxu0 0
          %2058 = vmatpush1.bf16.msra.mxu0 %v2041
          %2059 = vmatprep.subr.bf16.mxu0 0
          %2060 = vmatpush1.bf16.msra.mxu0 %v2042
          %2061 = vmatprep.subr.bf16.mxu0 0
          %2062 = vmatpush1.bf16.msra.mxu0 %v2043
          %2063 = vmatprep.subr.bf16.mxu0 0
          %2064 = vmatpush1.bf16.msra.mxu0 %v2044
          %2065 = vmatprep.subr.bf16.mxu0 0
          %2066 = vmatpush1.bf16.msra.mxu0 %v2045
          %2067 = vmatprep.subr.bf16.mxu0 0
          %2068 = vmatpush1.bf16.msra.mxu0 %v2046
          %2069 = vmatprep.subr.bf16.mxu0 0
          %2070 = vmatpush1.bf16.msra.mxu0 %v2047
          %2071 = vmatprep.subr.bf16.mxu0 0
          %2072 = vmatpush1.bf16.msra.mxu0 %v2048
          %2073 = vmatprep.subr.bf16.mxu0 0
          %2074 = vmatpush1.bf16.msra.mxu0 0
          %2075 = vmatprep.subr.bf16.mxu0 0
          %2076 = vmatpush1.bf16.msra.mxu0 0
          %2077 = vmatprep.subr.bf16.mxu0 0
          %2078 = vmatpush1.bf16.msra.mxu0 0
          %2079 = vmatprep.subr.bf16.mxu0 0
          %2080 = vmatpush1.bf16.msra.mxu0 0
          %2081 = vmatprep.subr.bf16.mxu0 0
          %2082 = vmatpush1.bf16.msra.mxu0 0
          %2083 = vmatprep.subr.bf16.mxu0 0
          %2084 = vmatpush1.bf16.msra.mxu0 0
          %2085 = vmatprep.subr.bf16.mxu0 0
          %2086 = vmatpush1.bf16.msra.mxu0 0
          %2087 = vmatprep.subr.bf16.mxu0 0
          %2088 = vmatpush1.bf16.msra.mxu0 0
          %2089 = vmatprep.mubr.bf16.mxu0 0
          %2090 = vmatmul.mubr.bf16.gmra.mrb[0].mxu0 %v1962
          %v2091 = vpop.f32.mrb[0].mxu0
          %v2092 = vadd.f32 %v2007, %v2091
          %v2093 = vpop.f32.mrb[0].mxu0
          %v2094 = vpop.f32.mrb[0].mxu0
          %v2095 = vadd.f32 %v2007, %v2094
          %v2096 = vpop.f32.mrb[0].mxu0
          %2097 = vmatprep.mubr.bf16.mxu0 0
          %2098 = vmatmul.mubr.bf16.gmra.mrb[0].mxu0 %v1963
          %v2099 = vpop.f32.mrb[0].mxu0
          %v2100 = vadd.f32 %v2007, %v2099
          %v2101 = vpop.f32.mrb[0].mxu0
          %v2102 = vpop.f32.mrb[0].mxu0
          %v2103 = vadd.f32 %v2007, %v2102
          %v2104 = vpop.f32.mrb[0].mxu0
          %2105 = vmatprep.mubr.bf16.mxu0 0
          %2106 = vmatmul.mubr.bf16.gmra.mrb[0].mxu0 %v1964
          %v2107 = vpop.f32.mrb[0].mxu0
          %v2108 = vadd.f32 %v2007, %v2107
          %v2109 = vpop.f32.mrb[0].mxu0
          %v2110 = vpop.f32.mrb[0].mxu0
          %v2111 = vadd.f32 %v2007, %v2110
          %v2112 = vpop.f32.mrb[0].mxu0
          %2113 = vmatprep.mubr.bf16.mxu0 0
          %2114 = vmatmul.mubr.bf16.gmra.mrb[0].mxu0 %v1965
          %v2115 = vpop.f32.mrb[0].mxu0
          %v2116 = vadd.f32 %v2007, %v2115
          %v2117 = vpop.f32.mrb[0].mxu0
          %v2118 = vpop.f32.mrb[0].mxu0
          %v2119 = vadd.f32 %v2007, %v2118
          %v2120 = vpop.f32.mrb[0].mxu0
          %2121 = vmatprep.mubr.bf16.mxu0 0
          %2122 = vmatmul.mubr.bf16.gmra.mrb[0].mxu0 %v1966
          %v2123 = vpop.f32.mrb[0].mxu0
          %v2124 = vadd.f32 %v2007, %v2123
          %v2125 = vpop.f32.mrb[0].mxu0
          %v2126 = vpop.f32.mrb[0].mxu0
          %v2127 = vadd.f32 %v2007, %v2126
          %v2128 = vpop.f32.mrb[0].mxu0
          %2129 = vmatprep.mubr.bf16.mxu0 0
          %2130 = vmatmul.mubr.bf16.gmra.mrb[0].mxu0 %v1967
          %v2131 = vpop.f32.mrb[0].mxu0
          %v2132 = vadd.f32 %v2007, %v2131
          %v2133 = vpop.f32.mrb[0].mxu0
          %v2134 = vpop.f32.mrb[0].mxu0
          %v2135 = vadd.f32 %v2007, %v2134
          %v2136 = vpop.f32.mrb[0].mxu0
          %2137 = vmatprep.mubr.bf16.mxu0 0
          %2138 = vmatmul.mubr.bf16.gmra.mrb[0].mxu0 %v1968
          %v2139 = vpop.f32.mrb[0].mxu0
          %v2140 = vadd.f32 %v2007, %v2139
          %v2141 = vpop.f32.mrb[0].mxu0
          %v2142 = vpop.f32.mrb[0].mxu0
          %v2143 = vadd.f32 %v2007, %v2142
          %v2144 = vpop.f32.mrb[0].mxu0
          %2145 = vmatprep.mubr.bf16.mxu0 0
          %2146 = vmatmul.mubr.bf16.gmra.mrb[0].mxu0 %v1969
          %v2147 = vpop.f32.mrb[0].mxu0
          %v2148 = vadd.f32 %v2007, %v2147
          %v2149 = vpop.f32.mrb[0].mxu0
          %v2150 = vpop.f32.mrb[0].mxu0
          %v2151 = vadd.f32 %v2007, %v2150
          %v2152 = vpop.f32.mrb[0].mxu0
          %2153 = vmatprep.mubr.bf16.mxu0 0
          %2154 = vmatmul.mubr.bf16.gmra.mrb[0].mxu0 %v1970
          %v2155 = vpop.f32.mrb[0].mxu0
          %v2156 = vadd.f32 %v2007, %v2155
          %v2157 = vpop.f32.mrb[0].mxu0
          %v2158 = vpop.f32.mrb[0].mxu0
          %v2159 = vadd.f32 %v2007, %v2158
          %v2160 = vpop.f32.mrb[0].mxu0
          %2161 = vmatprep.mubr.bf16.mxu0 0
          %2162 = vmatmul.mubr.bf16.gmra.mrb[0].mxu0 %v1971
          %v2163 = vpop.f32.mrb[0].mxu0
          %v2164 = vadd.f32 %v2007, %v2163
          %v2165 = vpop.f32.mrb[0].mxu0
          %v2166 = vpop.f32.mrb[0].mxu0
          %v2167 = vadd.f32 %v2007, %v2166
          %v2168 = vpop.f32.mrb[0].mxu0
          %2169 = vmatprep.mubr.bf16.mxu0 0
          %2170 = vmatmul.mubr.bf16.gmra.mrb[0].mxu0 %v1972
          %v2171 = vpop.f32.mrb[0].mxu0
          %v2172 = vadd.f32 %v2007, %v2171
          %v2173 = vpop.f32.mrb[0].mxu0
          %v2174 = vpop.f32.mrb[0].mxu0
          %v2175 = vadd.f32 %v2007, %v2174
          %v2176 = vpop.f32.mrb[0].mxu0
          %2177 = vmatprep.mubr.bf16.mxu0 0
          %2178 = vmatmul.mubr.bf16.gmra.mrb[0].mxu0 %v1973
          %v2179 = vpop.f32.mrb[0].mxu0
          %v2180 = vadd.f32 %v2007, %v2179
          %v2181 = vpop.f32.mrb[0].mxu0
          %v2182 = vpop.f32.mrb[0].mxu0
          %v2183 = vadd.f32 %v2007, %v2182
          %v2184 = vpop.f32.mrb[0].mxu0
          %2185 = vmatprep.mubr.bf16.mxu0 0
          %2186 = vmatmul.mubr.bf16.gmra.mrb[0].mxu0 %v1974
          %v2187 = vpop.f32.mrb[0].mxu0
          %v2188 = vadd.f32 %v2007, %v2187
          %v2189 = vpop.f32.mrb[0].mxu0
          %v2190 = vpop.f32.mrb[0].mxu0
          %v2191 = vadd.f32 %v2007, %v2190
          %v2192 = vpop.f32.mrb[0].mxu0
          %2193 = vmatprep.mubr.bf16.mxu0 0
          %2194 = vmatmul.mubr.bf16.gmra.mrb[0].mxu0 %v1975
          %v2195 = vpop.f32.mrb[0].mxu0
          %v2196 = vadd.f32 %v2007, %v2195
          %v2197 = vpop.f32.mrb[0].mxu0
          %v2198 = vpop.f32.mrb[0].mxu0
          %v2199 = vadd.f32 %v2007, %v2198
          %v2200 = vpop.f32.mrb[0].mxu0
          %2201 = vmatprep.mubr.bf16.mxu0 0
          %2202 = vmatmul.mubr.bf16.gmra.mrb[0].mxu0 %v1976
          %v2203 = vpop.f32.mrb[0].mxu0
          %v2204 = vadd.f32 %v2007, %v2203
          %v2205 = vpop.f32.mrb[0].mxu0
          %v2206 = vpop.f32.mrb[0].mxu0
          %v2207 = vadd.f32 %v2007, %v2206
          %v2208 = vpop.f32.mrb[0].mxu0
          %2209 = vmatprep.mubr.bf16.mxu0 0
          %2210 = vmatmul.mubr.bf16.gmra.mrb[0].mxu0 %v1977
          %v2211 = vpop.f32.mrb[0].mxu0
          %v2212 = vadd.f32 %v2007, %v2211
          %v2213 = vpop.f32.mrb[0].mxu0
          %v2214 = vpop.f32.mrb[0].mxu0
          %v2215 = vadd.f32 %v2007, %v2214
          %v2216 = vpop.f32.mrb[0].mxu0
          %2217 = vmatprep.mubr.bf16.mxu0 0
          %2218 = vmatmul.mubr.bf16.gmra.mrb[0].mxu0 %v1978
          %v2219 = vpop.f32.mrb[0].mxu0
          %v2220 = vadd.f32 %v2007, %v2219
          %v2221 = vpop.f32.mrb[0].mxu0
          %v2222 = vpop.f32.mrb[0].mxu0
          %v2223 = vadd.f32 %v2007, %v2222
          %v2224 = vpop.f32.mrb[0].mxu0
          %2225 = vmatprep.mubr.bf16.mxu0 0
          %2226 = vmatmul.mubr.bf16.gmra.mrb[0].mxu0 %v1979
          %v2227 = vpop.f32.mrb[0].mxu0
          %v2228 = vadd.f32 %v2007, %v2227
          %v2229 = vpop.f32.mrb[0].mxu0
          %v2230 = vpop.f32.mrb[0].mxu0
          %v2231 = vadd.f32 %v2007, %v2230
          %v2232 = vpop.f32.mrb[0].mxu0
          %2233 = vmatprep.mubr.bf16.mxu0 0
          %2234 = vmatmul.mubr.bf16.gmra.mrb[0].mxu0 %v1980
          %v2235 = vpop.f32.mrb[0].mxu0
          %v2236 = vadd.f32 %v2007, %v2235
          %v2237 = vpop.f32.mrb[0].mxu0
          %v2238 = vpop.f32.mrb[0].mxu0
          %v2239 = vadd.f32 %v2007, %v2238
          %v2240 = vpop.f32.mrb[0].mxu0
          %2241 = vmatprep.mubr.bf16.mxu0 0
          %2242 = vmatmul.mubr.bf16.gmra.mrb[0].mxu0 %v1981
          %v2243 = vpop.f32.mrb[0].mxu0
          %v2244 = vadd.f32 %v2007, %v2243
          %v2245 = vpop.f32.mrb[0].mxu0
          %v2246 = vpop.f32.mrb[0].mxu0
          %v2247 = vadd.f32 %v2007, %v2246
          %v2248 = vpop.f32.mrb[0].mxu0
          %2249 = vmatprep.mubr.bf16.mxu0 0
          %2250 = vmatmul.mubr.bf16.gmra.mrb[0].mxu0 %v1982
          %v2251 = vpop.f32.mrb[0].mxu0
          %v2252 = vadd.f32 %v2007, %v2251
          %v2253 = vpop.f32.mrb[0].mxu0
          %v2254 = vpop.f32.mrb[0].mxu0
          %v2255 = vadd.f32 %v2007, %v2254
          %v2256 = vpop.f32.mrb[0].mxu0
          %2257 = vmatprep.mubr.bf16.mxu0 0
          %2258 = vmatmul.mubr.bf16.gmra.mrb[0].mxu0 %v1983
          %v2259 = vpop.f32.mrb[0].mxu0
          %v2260 = vadd.f32 %v2007, %v2259
          %v2261 = vpop.f32.mrb[0].mxu0
          %v2262 = vpop.f32.mrb[0].mxu0
          %v2263 = vadd.f32 %v2007, %v2262
          %v2264 = vpop.f32.mrb[0].mxu0
          %2265 = vmatprep.mubr.bf16.mxu0 0
          %2266 = vmatmul.mubr.bf16.gmra.mrb[0].mxu0 %v1984
          %v2267 = vpop.f32.mrb[0].mxu0
          %v2268 = vadd.f32 %v2007, %v2267
          %v2269 = vpop.f32.mrb[0].mxu0
          %v2270 = vpop.f32.mrb[0].mxu0
          %v2271 = vadd.f32 %v2007, %v2270
          %v2272 = vpop.f32.mrb[0].mxu0
          %2273 = vmatprep.mubr.bf16.mxu0 0
          %2274 = vmatmul.mubr.bf16.gmra.mrb[0].mxu0 %v1985
          %v2275 = vpop.f32.mrb[0].mxu0
          %v2276 = vadd.f32 %v2007, %v2275
          %v2277 = vpop.f32.mrb[0].mxu0
          %v2278 = vpop.f32.mrb[0].mxu0
          %v2279 = vadd.f32 %v2007, %v2278
          %v2280 = vpop.f32.mrb[0].mxu0
          %2281 = vdwg.mxu0
          %2282 = vst [vmem:[#allocation13] sm:$0xff] %v2092
          %2283 = vst [vmem:[#allocation13 + $0x8] sm:$0xff] %v2095
          %2284 = vst [vmem:[#allocation13 + $0x10] sm:$0xff] %v2100
          %2285 = vst [vmem:[#allocation13 + $0x18] sm:$0xff] %v2103
          %2286 = vst [vmem:[#allocation13 + $0x20] sm:$0xff] %v2108
          %2287 = vst [vmem:[#allocation13 + $0x28] sm:$0xff] %v2111
          %2288 = vst [vmem:[#allocation13 + $0x30] sm:$0xff] %v2116
          %2289 = vst [vmem:[#allocation13 + $0x38] sm:$0xff] %v2119
          %2290 = vst [vmem:[#allocation13 + $0x40] sm:$0xff] %v2124
          %2291 = vst [vmem:[#allocation13 + $0x48] sm:$0xff] %v2127
          %2292 = vst [vmem:[#allocation13 + $0x50] sm:$0xff] %v2132
          %2293 = vst [vmem:[#allocation13 + $0x58] sm:$0xff] %v2135
          %2294 = vst [vmem:[#allocation13 + $0x60] sm:$0xff] %v2140
          %2295 = vst [vmem:[#allocation13 + $0x68] sm:$0xff] %v2143
          %2296 = vst [vmem:[#allocation13 + $0x70] sm:$0xff] %v2148
          %2297 = vst [vmem:[#allocation13 + $0x78] sm:$0xff] %v2151
          %2298 = vst [vmem:[#allocation13 + $0x80] sm:$0xff] %v2156
          %2299 = vst [vmem:[#allocation13 + $0x88] sm:$0xff] %v2159
          %2300 = vst [vmem:[#allocation13 + $0x90] sm:$0xff] %v2164
          %2301 = vst [vmem:[#allocation13 + $0x98] sm:$0xff] %v2167
          %2302 = vst [vmem:[#allocation13 + $0xa0] sm:$0xff] %v2172
          %2303 = vst [vmem:[#allocation13 + $0xa8] sm:$0xff] %v2175
          %2304 = vst [vmem:[#allocation13 + $0xb0] sm:$0xff] %v2180
          %2305 = vst [vmem:[#allocation13 + $0xb8] sm:$0xff] %v2183
          %2306 = vst [vmem:[#allocation13 + $0xc0] sm:$0xff] %v2188
          %2307 = vst [vmem:[#allocation13 + $0xc8] sm:$0xff] %v2191
          %2308 = vst [vmem:[#allocation13 + $0xd0] sm:$0xff] %v2196
          %2309 = vst [vmem:[#allocation13 + $0xd8] sm:$0xff] %v2199
          %2310 = vst [vmem:[#allocation13 + $0xe0] sm:$0xff] %v2204
          %2311 = vst [vmem:[#allocation13 + $0xe8] sm:$0xff] %v2207
          %2312 = vst [vmem:[#allocation13 + $0xf0] sm:$0xff] %v2212
          %2313 = vst [vmem:[#allocation13 + $0xf8] sm:$0xff] %v2215
          %2314 = vst [vmem:[#allocation13 + $0x100] sm:$0xff] %v2220
          %2315 = vst [vmem:[#allocation13 + $0x108] sm:$0xff] %v2223
          %2316 = vst [vmem:[#allocation13 + $0x110] sm:$0xff] %v2228
          %2317 = vst [vmem:[#allocation13 + $0x118] sm:$0xff] %v2231
          %2318 = vst [vmem:[#allocation13 + $0x120] sm:$0xff] %v2236
          %2319 = vst [vmem:[#allocation13 + $0x128] sm:$0xff] %v2239
          %2320 = vst [vmem:[#allocation13 + $0x130] sm:$0xff] %v2244
          %2321 = vst [vmem:[#allocation13 + $0x138] sm:$0xff] %v2247
          %2322 = vst [vmem:[#allocation13 + $0x140] sm:$0xff] %v2252
          %2323 = vst [vmem:[#allocation13 + $0x148] sm:$0xff] %v2255
          %2324 = vst [vmem:[#allocation13 + $0x150] sm:$0xff] %v2260
          %2325 = vst [vmem:[#allocation13 + $0x158] sm:$0xff] %v2263
          %2326 = vst [vmem:[#allocation13 + $0x160] sm:$0xff] %v2268
          %2327 = vst [vmem:[#allocation13 + $0x168] sm:$0xff] %v2271
          %2328 = vst [vmem:[#allocation13 + $0x170] sm:$0xff] %v2276
          %2329 = vst [vmem:[#allocation13 + $0x178] sm:$0xff] %v2279
        $region72: #{tpu_custom_call.1} parent=35 // pred_fallthru
          _
        // Predicated region
        $region73: #{tpu_custom_call.1} parent=35 // pred_check
          %p2330 = pneg %p148
        $region74: #{tpu_custom_call.1} parent=35 // pred_check_branch
          %2332 = sbr.rel (%p2330) target = $region76
        $region75: #{tpu_custom_call.1} parent=35 // pred_region
          %s2333 = smul.u32 48, %s26
          %s2335 = ssub.s32 6144, 6144
          %2336 = vsyncadd [#allocation8], %s2335
          %s2337 = smul.addr %s2333, 128
          %s2338 = scalar_lea.hbm %s5, %s2337
          %s2339 = sshll.u32 [#allocation13], 4
          %s2340 = int_to_ptr.vmem [resolvable:$true] %s2339
          %2345 = dma.vmem_to_hbm [thread:$0]  %s2340, 6144, %s2338, [#allocation8], 128, 128, 8
        $region76: #{tpu_custom_call.1} parent=35 // pred_fallthru
          _
        // Predicated region
        $region77: #{tpu_custom_call.1} parent=35 // pred_check
          %p2346 = pneg %p148
        $region78: #{tpu_custom_call.1} parent=35 // pred_check_branch
          %2348 = sbr.rel (%p2346) target = $region80
        $region79: #{tpu_custom_call.1} parent=35 // pred_region
          %2349 = dma.done [#allocation8], 6144
        $region80: #{tpu_custom_call.1} parent=35 // pred_fallthru
          _
      $region36: #{tpu_custom_call.1} parent=5 // pred_fallthru
        _
      %p2350 = scmp.le.s32.totalorder 2, %s15
      // Predicated region
      $region81: #{tpu_custom_call.1} parent=5 // pred_check
        %p2351 = pneg %p2350
      $region82: #{tpu_custom_call.1} parent=5 // pred_check_branch
        %2353 = sbr.rel (%p2351) target = $region84
      $region83: #{tpu_custom_call.1} parent=5 // pred_region
        %s2354 = ssub.s32 %s15, 2
      $region84: #{tpu_custom_call.1} parent=5 // pred_fallthru
        _
    $region6: #{tpu_custom_call.1} parent=1 // loop_footer
      %s19 = sadd.s32 1, %s15
    $region7: #{tpu_custom_call.1} parent=1 // loop_footer_branch
      %14 = sbr.rel target = $region3
    $region8: #{tpu_custom_call.1} parent=1 // loop_exit
      _
    %2355 = vsyncpa [#allocation7], 1
    %s2356 = scalar_lea.sflag [#allocation7], 1
    %2357 = vsyncpa %s2356, 1
    %2358 = vsyncpa [#allocation12], 1
    %2359 = vsyncpa [#allocation8], 1
    %s2360 = scalar_lea.sflag [#allocation8], 1
    %2361 = vsyncpa %s2360, 1
    %2362 = vsyncpa [#allocation9], 1
    %s2363 = scalar_lea.sflag [#allocation9], 1
    %2364 = vsyncpa %s2363, 1
  %2365 = vsyncmov [#allocation5]
  %s2366 = vpop.sfrf %2365
  %p2367 = scmp.eq.s32.totalorder %s2366, 0
  %p2368 = pneg %p2367
  %2370 = shalt.err (%p2368)

</llo_original>
